<compile_context>
chip_gen: v5e
topology: v5e:2x2
jax: 0.10.0
libtpu: 0.0.40
codegen_flags: <defaults>
</compile_context>

<pallas_src>
import functools
import numpy as np
import jax
import jax.numpy as jnp
from jax.experimental import pallas as pl
from jax.experimental.pallas import tpu as pltpu

# ----- SKLayer hyper-parameters (small but consistent with the module) -----
N, C, H, W = 2, 64, 8, 8          # batch, in_channels, spatial
G, M, R = 32, 2, 16               # groups, branches, reduction
D = max(C // R, 32)               # bottleneck dim d = max(C/r, 32) -> 32
PAD = M                           # pad with the max dilation; per-branch offsets below
HP, WP = H + 2 * PAD, W + 2 * PAD
HW = H * W
KFUSED = M * 9 * C                # 1152 = 9 * 128, vreg-aligned K
MC = M * C                        # 128-lane-dense branch-concatenated width
EPS = 1e-5


# ------------------------------- Pallas kernel ------------------------------
def sk_kernel(im_ref, w_ref, bias_ref, wfc_ref, fcaff_ref, wfcs_ref, o_ref):
    # im_ref:    (N*HW, M*9*C) bf16  fused dilated im2col (both branches along K)
    # w_ref:     (M*9*C, M*C)  bf16  block-diag grouped-conv weight, BN scale folded
    # bias_ref:  (1, M*C)      f32   folded BN biases, branch-concatenated
    # wfc_ref:   (C, D)        f32   1x1 squeeze conv
    # fcaff_ref: (2, D)        f32   row0 = folded BN scale, row1 = bias of the fc
    # wfcs_ref:  (D, M*C)      f32   per-branch 1x1 excitation convs, concatenated
    # o_ref:     (HW, N*C)     f32   lane-dense output slab
    rows = im_ref.shape[0]                                            # N * HW

    # Both branch grouped convs as ONE bf16 MXU matmul; output lanes are
    # [branch0 (C) | branch1 (C)].  BN scale already folded -> bias + ReLU only.
    feats = jnp.dot(im_ref[...], w_ref[...],
                    preferred_element_type=jnp.float32)               # (rows, MC)
    feats = jnp.maximum(feats + bias_ref[...], 0.0)

    # U = sum over branches (lane halves).
    U = feats[:, :C] + feats[:, C:]                                   # (rows, C)

    # Batched squeeze / excite epilogue (whole batch as 2-D ops).
    S = jnp.sum(U.reshape(N, HW, C), axis=1) * (1.0 / HW)             # (N, C)
    z = jnp.dot(S, wfc_ref[...], preferred_element_type=jnp.float32)  # (N, D)
    z = jnp.maximum(z * fcaff_ref[0:1, :] + fcaff_ref[1:2, :], 0.0)
    logits = jnp.dot(z, wfcs_ref[...],
                     preferred_element_type=jnp.float32)              # (N, MC)

    # Softmax over the M=2 branches (the two lane halves).
    l0, l1 = logits[:, :C], logits[:, C:]
    mx = jnp.maximum(l0, l1)
    e0, e1 = jnp.exp(l0 - mx), jnp.exp(l1 - mx)
    inv = pl.reciprocal(e0 + e1, approx=True)                         # EUP slot
    att = jnp.concatenate([e0 * inv, e1 * inv], axis=1)               # (N, MC)

    # Attention-weighted branch sum on full 128-lane vregs; emit a lane-dense
    # (HW, N*C) slab (batch elements side-by-side on lanes).
    Vs = []
    for b in range(N):
        wb = feats[b * HW:(b + 1) * HW, :] * att[b:b + 1, :]          # (HW, MC)
        Vs.append(wb[:, :C] + wb[:, C:])                              # (HW, C)
    del rows
    o_ref[...] = jnp.concatenate(Vs, axis=1).astype(o_ref.dtype)      # (HW, N*C)


# --------------------------------- wrapper ----------------------------------
def _im2col_fused(x_nchw):
    """NCHW input -> fused dilated im2col for both branches, (N*HW, M*9*C) bf16."""
    x_nhwc = jnp.transpose(x_nchw, (0, 2, 3, 1)).astype(jnp.bfloat16)
    x_pad = jnp.pad(x_nhwc, ((0, 0), (PAD, PAD), (PAD, PAD), (0, 0)))
    taps = []
    for m in range(M):
        dil = m + 1
        off = PAD - dil            # align the global PAD with per-branch padding=dil
        for ky in range(3):
            for kx in range(3):
                taps.append(x_pad[:, off + dil * ky: off + dil * ky + H,
                                  off + dil * kx: off + dil * kx + W, :])
    patches = jnp.stack(taps, axis=3)                                  # (N,H,W,M*9,C)
    return patches.reshape(N * HW, KFUSED)


def sk_layer_pallas(x_nchw, p):
    im = _im2col_fused(x_nchw)                                         # (N*HW, 1152)

    out = pl.pallas_call(
        sk_kernel,
        out_shape=jax.ShapeDtypeStruct((HW, N * C), jnp.float32),
        in_specs=[pl.BlockSpec(memory_space=pltpu.MemorySpace.VMEM)] * 6,
        out_specs=pl.BlockSpec(memory_space=pltpu.MemorySpace.VMEM),
    )(im, p["w_fused"], p["bias_cat"], p["wfc"], p["fc_aff"], p["wfcs_cat"])

    # (HW, N*C) lane-dense slab -> NCHW
    return jnp.transpose(out.reshape(H, W, N, C), (2, 3, 0, 1)).astype(x_nchw.dtype)


# --------------------------- deterministic params ---------------------------
def init_params(key):
    ks = jax.random.split(key, 11)
    cg = C // G
    # grouped conv weights, PyTorch layout (M, C_out, C_in/G, 3, 3)
    conv_w = jax.random.normal(ks[0], (M, C, cg, 3, 3), jnp.float32) * 0.2
    gamma = jax.random.uniform(ks[1], (M, C), minval=0.5, maxval=1.5)
    beta = jax.random.normal(ks[2], (M, C)) * 0.1
    mean = jax.random.normal(ks[3], (M, C)) * 0.1
    var = jax.random.uniform(ks[4], (M, C), minval=0.5, maxval=1.5)
    bn_scale = gamma / jnp.sqrt(var + EPS)
    bn_bias = beta - mean * bn_scale

    wfc_conv = jax.random.normal(ks[5], (D, C), jnp.float32) * 0.2     # Conv2d(C, D, 1)
    fgamma = jax.random.uniform(ks[6], (D,), minval=0.5, maxval=1.5)
    fbeta = jax.random.normal(ks[7], (D,)) * 0.1
    fmean = jax.random.normal(ks[8], (D,)) * 0.1
    fvar = jax.random.uniform(ks[9], (D,), minval=0.5, maxval=1.5)
    fc_scale = fgamma / jnp.sqrt(fvar + EPS)
    fc_bias = fbeta - fmean * fc_scale

    wfcs_conv = jax.random.normal(ks[10], (M, C, D), jnp.float32) * 0.2  # Conv2d(D, C, 1)

    # Dense block-diagonal grouped-conv weight (M, Cout, Cin, 3, 3); ~97% zeros
    # but tiny at C=64, kept dense so each branch conv is a plain matmul.
    dense = jnp.zeros((M, C, C, 3, 3), jnp.float32)
    for g in range(G):
        sl = slice(g * cg, (g + 1) * cg)
        dense = dense.at[:, sl, sl, :, :].set(conv_w[:, sl, :, :, :])
    # (M, ky, kx, Cin, Cout), fold BN scale into the Cout columns, flatten the
    # (tap, Cin) axes to match the im2col LHS.
    w = jnp.transpose(dense, (0, 3, 4, 2, 1)) * bn_scale[:, None, None, None, :]
    w_branch = w.reshape(M, 9 * C, C)
    # Fuse the two branches block-diagonally: (M*9*C, M*C), bf16 for the MXU.
    w_fused = jnp.zeros((KFUSED, MC), jnp.float32)
    for m in range(M):
        w_fused = w_fused.at[m * 9 * C:(m + 1) * 9 * C,
                             m * C:(m + 1) * C].set(w_branch[m])
    w_fused = w_fused.astype(jnp.bfloat16)

    return {
        # reference-side params
        "conv_w": conv_w, "bn_scale": bn_scale, "bn_bias": bn_bias,
        "fc_scale": fc_scale, "fc_bias": fc_bias,
        "wfcs": jnp.transpose(wfcs_conv, (0, 2, 1)),                   # (M, D, C)
        # kernel-side packed params
        "w_fused": w_fused,                                            # (1152, 128) bf16
        "bias_cat": bn_bias.reshape(1, MC),                            # (1, 128)
        "wfc": wfc_conv.T,                                             # (C, D)
        "fc_aff": jnp.stack([fc_scale, fc_bias], axis=0),              # (2, D)
        "wfcs_cat": jnp.transpose(wfcs_conv, (2, 0, 1)).reshape(D, MC),  # (D, 128)
    }


# --------------------------- pure-JAX reference -----------------------------
def ref_forward(x, p):
    feats = []
    for m in range(M):
        dil = m + 1
        y = jax.lax.conv_general_dilated(
            x, p["conv_w"][m], (1, 1), ((dil, dil), (dil, dil)),
            rhs_dilation=(dil, dil),
            dimension_numbers=("NCHW", "OIHW", "NCHW"),
            feature_group_count=G,
            precision=jax.lax.Precision.HIGHEST)
        y = y * p["bn_scale"][m][None, :, None, None] + p["bn_bias"][m][None, :, None, None]
        feats.append(jnp.maximum(y, 0.0))
    U = functools.reduce(lambda a, b: a + b, feats)
    s = jnp.mean(U, axis=(2, 3))                                        # (N, C)
    z = jnp.maximum(s @ p["wfc"] * p["fc_scale"][None, :] + p["fc_bias"][None, :], 0.0)
    logits = jnp.stack([z @ p["wfcs"][m] for m in range(M)], axis=1)    # (N, M, C)
    att = jax.nn.softmax(logits, axis=1)
    return functools.reduce(lambda a, b: a + b,
                            [feats[m] * att[:, m, :, None, None] for m in range(M)])


if __name__ == "__main__":
    key = jax.random.PRNGKey(0)
    kx, kp = jax.random.split(key)
    x = jax.random.normal(kx, (N, C, H, W), jnp.float32)
    params = init_params(kp)

    fwd = jax.jit(sk_layer_pallas)
    out = jax.block_until_ready(fwd(x, params))
    assert out.shape == (N, C, H, W)

    ref = ref_forward(x, params)
    # bf16 MXU operands (im2col + fused conv weight) vs an all-f32 HIGHEST-precision
    # reference -> tolerance reflects bf16 input rounding with f32 accumulation
    # (plus the approx EUP reciprocal in the softmax denominator).
    np.testing.assert_allclose(np.asarray(out), np.asarray(ref), atol=2e-2, rtol=2e-2)
    print("KERNEL_OK")
</pallas_src>

<mosaic_0001>
module attributes {stable_mosaic.version = 11 : i64} {
  func.func @sk_kernel(%arg0: memref<128x1152xbf16, #tpu.memory_space<vmem>>, %arg1: memref<1152x128xbf16, #tpu.memory_space<vmem>>, %arg2: memref<1x128xf32, #tpu.memory_space<vmem>>, %arg3: memref<64x32xf32, #tpu.memory_space<vmem>>, %arg4: memref<2x32xf32, #tpu.memory_space<vmem>>, %arg5: memref<32x128xf32, #tpu.memory_space<vmem>>, %arg6: memref<64x128xf32, #tpu.memory_space<vmem>>) attributes {dimension_semantics = [], scalar_prefetch = 0 : i64, scratch_operands = 0 : i64, tpu.core_type = #tpu.core_type<tc>} {
    %c0 = arith.constant 0 : index
    %c0_0 = arith.constant 0 : index
    %0 = vector.load %arg0[%c0, %c0_0] : memref<128x1152xbf16, #tpu.memory_space<vmem>>, vector<128x1152xbf16>
    %c0_1 = arith.constant 0 : index
    %c0_2 = arith.constant 0 : index
    %1 = vector.load %arg1[%c0_1, %c0_2] : memref<1152x128xbf16, #tpu.memory_space<vmem>>, vector<1152x128xbf16>
    %cst = arith.constant dense<0.000000e+00> : vector<128x128xf32>
    %2 = tpu.matmul %0, %1, %cst {dimension_numbers = #tpu.dot_dimension_numbers<[1], [0], [0], [1], [0, 0, 1, 1], [], []>} : vector<128x1152xbf16>, vector<1152x128xbf16>, vector<128x128xf32> -> vector<128x128xf32>
    %c0_3 = arith.constant 0 : index
    %c0_4 = arith.constant 0 : index
    %3 = vector.load %arg2[%c0_3, %c0_4] : memref<1x128xf32, #tpu.memory_space<vmem>>, vector<1x128xf32>
    %4 = vector.broadcast %3 : vector<1x128xf32> to vector<128x128xf32>
    %5 = arith.addf %2, %4 : vector<128x128xf32>
    %cst_5 = arith.constant 0.000000e+00 : f32
    %6 = vector.broadcast %cst_5 : f32 to vector<128x128xf32>
    %7 = arith.maximumf %5, %6 : vector<128x128xf32>
    %8 = vector.extract_strided_slice %7 {offsets = [0, 0], sizes = [128, 64], strides = [1, 1]} : vector<128x128xf32> to vector<128x64xf32>
    %9 = vector.extract_strided_slice %7 {offsets = [0, 64], sizes = [128, 64], strides = [1, 1]} : vector<128x128xf32> to vector<128x64xf32>
    %10 = arith.addf %8, %9 : vector<128x64xf32>
    %11 = vector.shape_cast %10 : vector<128x64xf32> to vector<2x64x64xf32>
    %cst_6 = arith.constant dense<0.000000e+00> : vector<2x64xf32>
    %12 = vector.multi_reduction <add>, %11, %cst_6 [1] : vector<2x64x64xf32> to vector<2x64xf32>
    %cst_7 = arith.constant 1.562500e-02 : f32
    %13 = vector.broadcast %cst_7 : f32 to vector<2x64xf32>
    %14 = arith.mulf %12, %13 : vector<2x64xf32>
    %c0_8 = arith.constant 0 : index
    %c0_9 = arith.constant 0 : index
    %15 = vector.load %arg3[%c0_8, %c0_9] : memref<64x32xf32, #tpu.memory_space<vmem>>, vector<64x32xf32>
    %cst_10 = arith.constant dense<0.000000e+00> : vector<2x32xf32>
    %16 = tpu.matmul %14, %15, %cst_10 {dimension_numbers = #tpu.dot_dimension_numbers<[1], [0], [0], [1], [0, 0, 1, 1], [], []>} : vector<2x64xf32>, vector<64x32xf32>, vector<2x32xf32> -> vector<2x32xf32>
    %c0_11 = arith.constant 0 : index
    %c0_12 = arith.constant 0 : index
    %17 = vector.load %arg4[%c0_11, %c0_12] : memref<2x32xf32, #tpu.memory_space<vmem>>, vector<1x32xf32>
    %18 = vector.broadcast %17 : vector<1x32xf32> to vector<2x32xf32>
    %19 = arith.mulf %16, %18 : vector<2x32xf32>
    %c1 = arith.constant 1 : index
    %c0_13 = arith.constant 0 : index
    %20 = vector.load %arg4[%c1, %c0_13] : memref<2x32xf32, #tpu.memory_space<vmem>>, vector<1x32xf32>
    %21 = vector.broadcast %20 : vector<1x32xf32> to vector<2x32xf32>
    %22 = arith.addf %19, %21 : vector<2x32xf32>
    %cst_14 = arith.constant 0.000000e+00 : f32
    %23 = vector.broadcast %cst_14 : f32 to vector<2x32xf32>
    %24 = arith.maximumf %22, %23 : vector<2x32xf32>
    %c0_15 = arith.constant 0 : index
    %c0_16 = arith.constant 0 : index
    %25 = vector.load %arg5[%c0_15, %c0_16] : memref<32x128xf32, #tpu.memory_space<vmem>>, vector<32x128xf32>
    %cst_17 = arith.constant dense<0.000000e+00> : vector<2x128xf32>
    %26 = tpu.matmul %24, %25, %cst_17 {dimension_numbers = #tpu.dot_dimension_numbers<[1], [0], [0], [1], [0, 0, 1, 1], [], []>} : vector<2x32xf32>, vector<32x128xf32>, vector<2x128xf32> -> vector<2x128xf32>
    %27 = vector.extract_strided_slice %26 {offsets = [0, 0], sizes = [2, 64], strides = [1, 1]} : vector<2x128xf32> to vector<2x64xf32>
    %28 = vector.extract_strided_slice %26 {offsets = [0, 64], sizes = [2, 64], strides = [1, 1]} : vector<2x128xf32> to vector<2x64xf32>
    %29 = arith.maximumf %27, %28 : vector<2x64xf32>
    %30 = arith.subf %27, %29 : vector<2x64xf32>
    %31 = math.exp %30 : vector<2x64xf32>
    %32 = arith.subf %28, %29 : vector<2x64xf32>
    %33 = math.exp %32 : vector<2x64xf32>
    %34 = arith.addf %31, %33 : vector<2x64xf32>
    %35 = tpu.reciprocal %34 {approx = true} : vector<2x64xf32> -> vector<2x64xf32>
    %36 = arith.mulf %31, %35 : vector<2x64xf32>
    %37 = arith.mulf %33, %35 : vector<2x64xf32>
    %38 = tpu.concatenate %36, %37 in 1 : vector<2x64xf32>, vector<2x64xf32> -> vector<2x128xf32>
    %39 = vector.extract_strided_slice %7 {offsets = [0, 0], sizes = [64, 128], strides = [1, 1]} : vector<128x128xf32> to vector<64x128xf32>
    %40 = vector.extract_strided_slice %38 {offsets = [0, 0], sizes = [1, 128], strides = [1, 1]} : vector<2x128xf32> to vector<1x128xf32>
    %41 = vector.broadcast %40 : vector<1x128xf32> to vector<64x128xf32>
    %42 = arith.mulf %39, %41 : vector<64x128xf32>
    %43 = vector.extract_strided_slice %42 {offsets = [0, 0], sizes = [64, 64], strides = [1, 1]} : vector<64x128xf32> to vector<64x64xf32>
    %44 = vector.extract_strided_slice %42 {offsets = [0, 64], sizes = [64, 64], strides = [1, 1]} : vector<64x128xf32> to vector<64x64xf32>
    %45 = arith.addf %43, %44 : vector<64x64xf32>
    %46 = vector.extract_strided_slice %7 {offsets = [64, 0], sizes = [64, 128], strides = [1, 1]} : vector<128x128xf32> to vector<64x128xf32>
    %47 = vector.extract_strided_slice %38 {offsets = [1, 0], sizes = [1, 128], strides = [1, 1]} : vector<2x128xf32> to vector<1x128xf32>
    %48 = vector.broadcast %47 : vector<1x128xf32> to vector<64x128xf32>
    %49 = arith.mulf %46, %48 : vector<64x128xf32>
    %50 = vector.extract_strided_slice %49 {offsets = [0, 0], sizes = [64, 64], strides = [1, 1]} : vector<64x128xf32> to vector<64x64xf32>
    %51 = vector.extract_strided_slice %49 {offsets = [0, 64], sizes = [64, 64], strides = [1, 1]} : vector<64x128xf32> to vector<64x64xf32>
    %52 = arith.addf %50, %51 : vector<64x64xf32>
    %53 = tpu.concatenate %45, %52 in 1 : vector<64x64xf32>, vector<64x64xf32> -> vector<64x128xf32>
    %c0_18 = arith.constant 0 : index
    %c0_19 = arith.constant 0 : index
    %54 = vector.load %arg6[%c0_18, %c0_19] : memref<64x128xf32, #tpu.memory_space<vmem>>, vector<64x128xf32>
    tpu.vector_store %arg6[%c0_18, %c0_19], %53 {strides = array<i32>} : memref<64x128xf32, #tpu.memory_space<vmem>>, vector<64x128xf32>,
    return
  }
}

</mosaic_0001>

<llo_original>
// kernel: sk_layer_pallas.1
$region0: #{sk_layer_pallas.1}
  #allocation0 [shape = 'u32[]', space=smem, size = 0x4, offset = 0x4, fixed_abs, tag = 'smem constant byte address 0x4 - core index']
  #allocation1 [shape = 'u32[72,128]{1,0:T(1,128)}', space=vmem, size = 0x9000, scoped, tag = 'internal scratch']
  %s0 = inlined_call_operand.vmem [shape: bf16[128,1152], index: 0, kind: input, shape index: {}]
  %s1 = inlined_call_operand.vmem [shape: bf16[1152,128], index: 1, kind: input, shape index: {}]
  %s2 = inlined_call_operand.vmem [shape: f32[1,128], index: 2, kind: input, shape index: {}]
  %s3 = inlined_call_operand.vmem [shape: f32[64,32], index: 3, kind: input, shape index: {}]
  %s4 = inlined_call_operand.vmem [shape: f32[2,32], index: 4, kind: input, shape index: {}]
  %s5 = inlined_call_operand.vmem [shape: f32[32,128], index: 5, kind: input, shape index: {}]
  %s6 = inlined_call_operand.vmem [shape: f32[64,128], index: 6, kind: output, shape index: {}]
  %s7 = sld [smem:[#allocation0]]
  $region34: #{sk_layer_pallas.1} parent=0
    _
  %s9 = ssub.s32 1, %s7
  %s10 = scalar_select 0, %s9, %s7
  // Predicated region
  $region2: #{sk_layer_pallas.1} parent=0 // pred_check
    _
  $region3: #{sk_layer_pallas.1} parent=0 // pred_check_branch
    %12 = sbr.rel (0) target = $region5
  $region4: #{sk_layer_pallas.1} parent=0 // pred_region
    _
  $region5: #{sk_layer_pallas.1} parent=0 // pred_fallthru
    _
  // Predicated region
  $region6: #{sk_layer_pallas.1} parent=0 // pred_check
    _
  $region7: #{sk_layer_pallas.1} parent=0 // pred_check_branch
    %14 = sbr.rel (0) target = $region9
  $region8: #{sk_layer_pallas.1} parent=0 // pred_region
    _
  $region9: #{sk_layer_pallas.1} parent=0 // pred_fallthru
    _
  // Predicated region
  $region10: #{sk_layer_pallas.1} parent=0 // pred_check
    _
  $region11: #{sk_layer_pallas.1} parent=0 // pred_check_branch
    %16 = sbr.rel (0) target = $region13
  $region12: #{sk_layer_pallas.1} parent=0 // pred_region
    _
  $region13: #{sk_layer_pallas.1} parent=0 // pred_fallthru
    _
  // Predicated region
  $region14: #{sk_layer_pallas.1} parent=0 // pred_check
    _
  $region15: #{sk_layer_pallas.1} parent=0 // pred_check_branch
    %18 = sbr.rel (0) target = $region17
  $region16: #{sk_layer_pallas.1} parent=0 // pred_region
    _
  $region17: #{sk_layer_pallas.1} parent=0 // pred_fallthru
    _
  // Predicated region
  $region18: #{sk_layer_pallas.1} parent=0 // pred_check
    _
  $region19: #{sk_layer_pallas.1} parent=0 // pred_check_branch
    %20 = sbr.rel (0) target = $region21
  $region20: #{sk_layer_pallas.1} parent=0 // pred_region
    _
  $region21: #{sk_layer_pallas.1} parent=0 // pred_fallthru
    _
  // Predicated region
  $region22: #{sk_layer_pallas.1} parent=0 // pred_check
    _
  $region23: #{sk_layer_pallas.1} parent=0 // pred_check_branch
    %22 = sbr.rel (0) target = $region25
  $region24: #{sk_layer_pallas.1} parent=0 // pred_region
    _
  $region25: #{sk_layer_pallas.1} parent=0 // pred_fallthru
    _
  %v23 = vld [vmem:[%s0] sm:$0xff]
  %v24 = vld [vmem:[%s0 + $0x8] sm:$0xff]
  %v25 = vld [vmem:[%s0 + $0x10] sm:$0xff]
  %v26 = vld [vmem:[%s0 + $0x18] sm:$0xff]
  %v27 = vld [vmem:[%s0 + $0x20] sm:$0xf]
  %v28 = vld [vmem:[%s0 + $0x24] sm:$0xff]
  %v29 = vld [vmem:[%s0 + $0x2c] sm:$0xff]
  %v30 = vld [vmem:[%s0 + $0x34] sm:$0xff]
  %v31 = vld [vmem:[%s0 + $0x3c] sm:$0xff]
  %v32 = vld [vmem:[%s0 + $0x44] sm:$0xf]
  %v33 = vld [vmem:[%s0 + $0x48] sm:$0xff]
  %v34 = vld [vmem:[%s0 + $0x50] sm:$0xff]
  %v35 = vld [vmem:[%s0 + $0x58] sm:$0xff]
  %v36 = vld [vmem:[%s0 + $0x60] sm:$0xff]
  %v37 = vld [vmem:[%s0 + $0x68] sm:$0xf]
  %v38 = vld [vmem:[%s0 + $0x6c] sm:$0xff]
  %v39 = vld [vmem:[%s0 + $0x74] sm:$0xff]
  %v40 = vld [vmem:[%s0 + $0x7c] sm:$0xff]
  %v41 = vld [vmem:[%s0 + $0x84] sm:$0xff]
  %v42 = vld [vmem:[%s0 + $0x8c] sm:$0xf]
  %v43 = vld [vmem:[%s0 + $0x90] sm:$0xff]
  %v44 = vld [vmem:[%s0 + $0x98] sm:$0xff]
  %v45 = vld [vmem:[%s0 + $0xa0] sm:$0xff]
  %v46 = vld [vmem:[%s0 + $0xa8] sm:$0xff]
  %v47 = vld [vmem:[%s0 + $0xb0] sm:$0xf]
  %v48 = vld [vmem:[%s0 + $0xb4] sm:$0xff]
  %v49 = vld [vmem:[%s0 + $0xbc] sm:$0xff]
  %v50 = vld [vmem:[%s0 + $0xc4] sm:$0xff]
  %v51 = vld [vmem:[%s0 + $0xcc] sm:$0xff]
  %v52 = vld [vmem:[%s0 + $0xd4] sm:$0xf]
  %v53 = vld [vmem:[%s0 + $0xd8] sm:$0xff]
  %v54 = vld [vmem:[%s0 + $0xe0] sm:$0xff]
  %v55 = vld [vmem:[%s0 + $0xe8] sm:$0xff]
  %v56 = vld [vmem:[%s0 + $0xf0] sm:$0xff]
  %v57 = vld [vmem:[%s0 + $0xf8] sm:$0xf]
  %v58 = vld [vmem:[%s0 + $0xfc] sm:$0xff]
  %v59 = vld [vmem:[%s0 + $0x104] sm:$0xff]
  %v60 = vld [vmem:[%s0 + $0x10c] sm:$0xff]
  %v61 = vld [vmem:[%s0 + $0x114] sm:$0xff]
  %v62 = vld [vmem:[%s0 + $0x11c] sm:$0xf]
  %v63 = vld [vmem:[%s0 + $0x120] sm:$0xff]
  %v64 = vld [vmem:[%s0 + $0x128] sm:$0xff]
  %v65 = vld [vmem:[%s0 + $0x130] sm:$0xff]
  %v66 = vld [vmem:[%s0 + $0x138] sm:$0xff]
  %v67 = vld [vmem:[%s0 + $0x140] sm:$0xf]
  %v68 = vld [vmem:[%s0 + $0x144] sm:$0xff]
  %v69 = vld [vmem:[%s0 + $0x14c] sm:$0xff]
  %v70 = vld [vmem:[%s0 + $0x154] sm:$0xff]
  %v71 = vld [vmem:[%s0 + $0x15c] sm:$0xff]
  %v72 = vld [vmem:[%s0 + $0x164] sm:$0xf]
  %v73 = vld [vmem:[%s0 + $0x168] sm:$0xff]
  %v74 = vld [vmem:[%s0 + $0x170] sm:$0xff]
  %v75 = vld [vmem:[%s0 + $0x178] sm:$0xff]
  %v76 = vld [vmem:[%s0 + $0x180] sm:$0xff]
  %v77 = vld [vmem:[%s0 + $0x188] sm:$0xf]
  %v78 = vld [vmem:[%s0 + $0x18c] sm:$0xff]
  %v79 = vld [vmem:[%s0 + $0x194] sm:$0xff]
  %v80 = vld [vmem:[%s0 + $0x19c] sm:$0xff]
  %v81 = vld [vmem:[%s0 + $0x1a4] sm:$0xff]
  %v82 = vld [vmem:[%s0 + $0x1ac] sm:$0xf]
  %v83 = vld [vmem:[%s0 + $0x1b0] sm:$0xff]
  %v84 = vld [vmem:[%s0 + $0x1b8] sm:$0xff]
  %v85 = vld [vmem:[%s0 + $0x1c0] sm:$0xff]
  %v86 = vld [vmem:[%s0 + $0x1c8] sm:$0xff]
  %v87 = vld [vmem:[%s0 + $0x1d0] sm:$0xf]
  %v88 = vld [vmem:[%s0 + $0x1d4] sm:$0xff]
  %v89 = vld [vmem:[%s0 + $0x1dc] sm:$0xff]
  %v90 = vld [vmem:[%s0 + $0x1e4] sm:$0xff]
  %v91 = vld [vmem:[%s0 + $0x1ec] sm:$0xff]
  %v92 = vld [vmem:[%s0 + $0x1f4] sm:$0xf]
  %v93 = vld [vmem:[%s0 + $0x1f8] sm:$0xff]
  %v94 = vld [vmem:[%s0 + $0x200] sm:$0xff]
  %v95 = vld [vmem:[%s0 + $0x208] sm:$0xff]
  %v96 = vld [vmem:[%s0 + $0x210] sm:$0xff]
  %v97 = vld [vmem:[%s0 + $0x218] sm:$0xf]
  %v98 = vld [vmem:[%s0 + $0x21c] sm:$0xff]
  %v99 = vld [vmem:[%s0 + $0x224] sm:$0xff]
  %v100 = vld [vmem:[%s0 + $0x22c] sm:$0xff]
  %v101 = vld [vmem:[%s0 + $0x234] sm:$0xff]
  %v102 = vld [vmem:[%s0 + $0x23c] sm:$0xf]
  %v103 = vld [vmem:[%s1] sm:$0xf]
  %v104 = vld [vmem:[%s1 + $0x4] sm:$0xf]
  %v105 = vld [vmem:[%s1 + $0x8] sm:$0xf]
  %v106 = vld [vmem:[%s1 + $0xc] sm:$0xf]
  %v107 = vld [vmem:[%s1 + $0x10] sm:$0xf]
  %v108 = vld [vmem:[%s1 + $0x14] sm:$0xf]
  %v109 = vld [vmem:[%s1 + $0x18] sm:$0xf]
  %v110 = vld [vmem:[%s1 + $0x1c] sm:$0xf]
  %v111 = vld [vmem:[%s1 + $0x20] sm:$0xf]
  %v112 = vld [vmem:[%s1 + $0x24] sm:$0xf]
  %v113 = vld [vmem:[%s1 + $0x28] sm:$0xf]
  %v114 = vld [vmem:[%s1 + $0x2c] sm:$0xf]
  %v115 = vld [vmem:[%s1 + $0x30] sm:$0xf]
  %v116 = vld [vmem:[%s1 + $0x34] sm:$0xf]
  %v117 = vld [vmem:[%s1 + $0x38] sm:$0xf]
  %v118 = vld [vmem:[%s1 + $0x3c] sm:$0xf]
  %v119 = vld [vmem:[%s1 + $0x40] sm:$0xf]
  %v120 = vld [vmem:[%s1 + $0x44] sm:$0xf]
  %v121 = vld [vmem:[%s1 + $0x48] sm:$0xf]
  %v122 = vld [vmem:[%s1 + $0x4c] sm:$0xf]
  %v123 = vld [vmem:[%s1 + $0x50] sm:$0xf]
  %v124 = vld [vmem:[%s1 + $0x54] sm:$0xf]
  %v125 = vld [vmem:[%s1 + $0x58] sm:$0xf]
  %v126 = vld [vmem:[%s1 + $0x5c] sm:$0xf]
  %v127 = vld [vmem:[%s1 + $0x60] sm:$0xf]
  %v128 = vld [vmem:[%s1 + $0x64] sm:$0xf]
  %v129 = vld [vmem:[%s1 + $0x68] sm:$0xf]
  %v130 = vld [vmem:[%s1 + $0x6c] sm:$0xf]
  %v131 = vld [vmem:[%s1 + $0x70] sm:$0xf]
  %v132 = vld [vmem:[%s1 + $0x74] sm:$0xf]
  %v133 = vld [vmem:[%s1 + $0x78] sm:$0xf]
  %v134 = vld [vmem:[%s1 + $0x7c] sm:$0xf]
  %v135 = vld [vmem:[%s1 + $0x80] sm:$0xf]
  %v136 = vld [vmem:[%s1 + $0x84] sm:$0xf]
  %v137 = vld [vmem:[%s1 + $0x88] sm:$0xf]
  %v138 = vld [vmem:[%s1 + $0x8c] sm:$0xf]
  %v139 = vld [vmem:[%s1 + $0x90] sm:$0xf]
  %v140 = vld [vmem:[%s1 + $0x94] sm:$0xf]
  %v141 = vld [vmem:[%s1 + $0x98] sm:$0xf]
  %v142 = vld [vmem:[%s1 + $0x9c] sm:$0xf]
  %v143 = vld [vmem:[%s1 + $0xa0] sm:$0xf]
  %v144 = vld [vmem:[%s1 + $0xa4] sm:$0xf]
  %v145 = vld [vmem:[%s1 + $0xa8] sm:$0xf]
  %v146 = vld [vmem:[%s1 + $0xac] sm:$0xf]
  %v147 = vld [vmem:[%s1 + $0xb0] sm:$0xf]
  %v148 = vld [vmem:[%s1 + $0xb4] sm:$0xf]
  %v149 = vld [vmem:[%s1 + $0xb8] sm:$0xf]
  %v150 = vld [vmem:[%s1 + $0xbc] sm:$0xf]
  %v151 = vld [vmem:[%s1 + $0xc0] sm:$0xf]
  %v152 = vld [vmem:[%s1 + $0xc4] sm:$0xf]
  %v153 = vld [vmem:[%s1 + $0xc8] sm:$0xf]
  %v154 = vld [vmem:[%s1 + $0xcc] sm:$0xf]
  %v155 = vld [vmem:[%s1 + $0xd0] sm:$0xf]
  %v156 = vld [vmem:[%s1 + $0xd4] sm:$0xf]
  %v157 = vld [vmem:[%s1 + $0xd8] sm:$0xf]
  %v158 = vld [vmem:[%s1 + $0xdc] sm:$0xf]
  %v159 = vld [vmem:[%s1 + $0xe0] sm:$0xf]
  %v160 = vld [vmem:[%s1 + $0xe4] sm:$0xf]
  %v161 = vld [vmem:[%s1 + $0xe8] sm:$0xf]
  %v162 = vld [vmem:[%s1 + $0xec] sm:$0xf]
  %v163 = vld [vmem:[%s1 + $0xf0] sm:$0xf]
  %v164 = vld [vmem:[%s1 + $0xf4] sm:$0xf]
  %v165 = vld [vmem:[%s1 + $0xf8] sm:$0xf]
  %v166 = vld [vmem:[%s1 + $0xfc] sm:$0xf]
  %v167 = vld [vmem:[%s1 + $0x100] sm:$0xf]
  %v168 = vld [vmem:[%s1 + $0x104] sm:$0xf]
  %v169 = vld [vmem:[%s1 + $0x108] sm:$0xf]
  %v170 = vld [vmem:[%s1 + $0x10c] sm:$0xf]
  %v171 = vld [vmem:[%s1 + $0x110] sm:$0xf]
  %v172 = vld [vmem:[%s1 + $0x114] sm:$0xf]
  %v173 = vld [vmem:[%s1 + $0x118] sm:$0xf]
  %v174 = vld [vmem:[%s1 + $0x11c] sm:$0xf]
  %v175 = vld [vmem:[%s1 + $0x120] sm:$0xf]
  %v176 = vld [vmem:[%s1 + $0x124] sm:$0xf]
  %v177 = vld [vmem:[%s1 + $0x128] sm:$0xf]
  %v178 = vld [vmem:[%s1 + $0x12c] sm:$0xf]
  %v179 = vld [vmem:[%s1 + $0x130] sm:$0xf]
  %v180 = vld [vmem:[%s1 + $0x134] sm:$0xf]
  %v181 = vld [vmem:[%s1 + $0x138] sm:$0xf]
  %v182 = vld [vmem:[%s1 + $0x13c] sm:$0xf]
  %v183 = vld [vmem:[%s1 + $0x140] sm:$0xf]
  %v184 = vld [vmem:[%s1 + $0x144] sm:$0xf]
  %v185 = vld [vmem:[%s1 + $0x148] sm:$0xf]
  %v186 = vld [vmem:[%s1 + $0x14c] sm:$0xf]
  %v187 = vld [vmem:[%s1 + $0x150] sm:$0xf]
  %v188 = vld [vmem:[%s1 + $0x154] sm:$0xf]
  %v189 = vld [vmem:[%s1 + $0x158] sm:$0xf]
  %v190 = vld [vmem:[%s1 + $0x15c] sm:$0xf]
  %v191 = vld [vmem:[%s1 + $0x160] sm:$0xf]
  %v192 = vld [vmem:[%s1 + $0x164] sm:$0xf]
  %v193 = vld [vmem:[%s1 + $0x168] sm:$0xf]
  %v194 = vld [vmem:[%s1 + $0x16c] sm:$0xf]
  %v195 = vld [vmem:[%s1 + $0x170] sm:$0xf]
  %v196 = vld [vmem:[%s1 + $0x174] sm:$0xf]
  %v197 = vld [vmem:[%s1 + $0x178] sm:$0xf]
  %v198 = vld [vmem:[%s1 + $0x17c] sm:$0xf]
  %v199 = vld [vmem:[%s1 + $0x180] sm:$0xf]
  %v200 = vld [vmem:[%s1 + $0x184] sm:$0xf]
  %v201 = vld [vmem:[%s1 + $0x188] sm:$0xf]
  %v202 = vld [vmem:[%s1 + $0x18c] sm:$0xf]
  %v203 = vld [vmem:[%s1 + $0x190] sm:$0xf]
  %v204 = vld [vmem:[%s1 + $0x194] sm:$0xf]
  %v205 = vld [vmem:[%s1 + $0x198] sm:$0xf]
  %v206 = vld [vmem:[%s1 + $0x19c] sm:$0xf]
  %v207 = vld [vmem:[%s1 + $0x1a0] sm:$0xf]
  %v208 = vld [vmem:[%s1 + $0x1a4] sm:$0xf]
  %v209 = vld [vmem:[%s1 + $0x1a8] sm:$0xf]
  %v210 = vld [vmem:[%s1 + $0x1ac] sm:$0xf]
  %v211 = vld [vmem:[%s1 + $0x1b0] sm:$0xf]
  %v212 = vld [vmem:[%s1 + $0x1b4] sm:$0xf]
  %v213 = vld [vmem:[%s1 + $0x1b8] sm:$0xf]
  %v214 = vld [vmem:[%s1 + $0x1bc] sm:$0xf]
  %v215 = vld [vmem:[%s1 + $0x1c0] sm:$0xf]
  %v216 = vld [vmem:[%s1 + $0x1c4] sm:$0xf]
  %v217 = vld [vmem:[%s1 + $0x1c8] sm:$0xf]
  %v218 = vld [vmem:[%s1 + $0x1cc] sm:$0xf]
  %v219 = vld [vmem:[%s1 + $0x1d0] sm:$0xf]
  %v220 = vld [vmem:[%s1 + $0x1d4] sm:$0xf]
  %v221 = vld [vmem:[%s1 + $0x1d8] sm:$0xf]
  %v222 = vld [vmem:[%s1 + $0x1dc] sm:$0xf]
  %v223 = vld [vmem:[%s1 + $0x1e0] sm:$0xf]
  %v224 = vld [vmem:[%s1 + $0x1e4] sm:$0xf]
  %v225 = vld [vmem:[%s1 + $0x1e8] sm:$0xf]
  %v226 = vld [vmem:[%s1 + $0x1ec] sm:$0xf]
  %v227 = vld [vmem:[%s1 + $0x1f0] sm:$0xf]
  %v228 = vld [vmem:[%s1 + $0x1f4] sm:$0xf]
  %v229 = vld [vmem:[%s1 + $0x1f8] sm:$0xf]
  %v230 = vld [vmem:[%s1 + $0x1fc] sm:$0xf]
  %v231 = vld [vmem:[%s1 + $0x200] sm:$0xf]
  %v232 = vld [vmem:[%s1 + $0x204] sm:$0xf]
  %v233 = vld [vmem:[%s1 + $0x208] sm:$0xf]
  %v234 = vld [vmem:[%s1 + $0x20c] sm:$0xf]
  %v235 = vld [vmem:[%s1 + $0x210] sm:$0xf]
  %v236 = vld [vmem:[%s1 + $0x214] sm:$0xf]
  %v237 = vld [vmem:[%s1 + $0x218] sm:$0xf]
  %v238 = vld [vmem:[%s1 + $0x21c] sm:$0xf]
  %v239 = vld [vmem:[%s1 + $0x220] sm:$0xf]
  %v240 = vld [vmem:[%s1 + $0x224] sm:$0xf]
  %v241 = vld [vmem:[%s1 + $0x228] sm:$0xf]
  %v242 = vld [vmem:[%s1 + $0x22c] sm:$0xf]
  %v243 = vld [vmem:[%s1 + $0x230] sm:$0xf]
  %v244 = vld [vmem:[%s1 + $0x234] sm:$0xf]
  %v245 = vld [vmem:[%s1 + $0x238] sm:$0xf]
  %v246 = vld [vmem:[%s1 + $0x23c] sm:$0xf]
  %v247 = vld [vmem:[%s2] sm:$0x1]
  %v249 = vperm.slane %v247, 0
  %v331 = vunpack.c.l.b16 %v23
  %v332 = vunpack.c.h.b16 %v23
  %v333 = vunpack.c.l.b16 %v24
  %v334 = vunpack.c.h.b16 %v24
  %v335 = vunpack.c.l.b16 %v25
  %v336 = vunpack.c.h.b16 %v25
  %v337 = vunpack.c.l.b16 %v26
  %v338 = vunpack.c.h.b16 %v26
  %v339 = vunpack.c.l.b16 %v27
  %v340 = vunpack.c.l.b16 %v28
  %v341 = vunpack.c.h.b16 %v28
  %v342 = vunpack.c.l.b16 %v29
  %v343 = vunpack.c.h.b16 %v29
  %v344 = vunpack.c.l.b16 %v30
  %v345 = vunpack.c.h.b16 %v30
  %v346 = vunpack.c.l.b16 %v31
  %v347 = vunpack.c.h.b16 %v31
  %v348 = vunpack.c.l.b16 %v32
  %v349 = vunpack.c.l.b16 %v33
  %v350 = vunpack.c.h.b16 %v33
  %v351 = vunpack.c.l.b16 %v34
  %v352 = vunpack.c.h.b16 %v34
  %v353 = vunpack.c.l.b16 %v35
  %v354 = vunpack.c.h.b16 %v35
  %v355 = vunpack.c.l.b16 %v36
  %v356 = vunpack.c.h.b16 %v36
  %v357 = vunpack.c.l.b16 %v37
  %v358 = vunpack.c.l.b16 %v38
  %v359 = vunpack.c.h.b16 %v38
  %v360 = vunpack.c.l.b16 %v39
  %v361 = vunpack.c.h.b16 %v39
  %v362 = vunpack.c.l.b16 %v40
  %v363 = vunpack.c.h.b16 %v40
  %v364 = vunpack.c.l.b16 %v41
  %v365 = vunpack.c.h.b16 %v41
  %v366 = vunpack.c.l.b16 %v42
  %v367 = vunpack.c.l.b16 %v43
  %v368 = vunpack.c.h.b16 %v43
  %v369 = vunpack.c.l.b16 %v44
  %v370 = vunpack.c.h.b16 %v44
  %v371 = vunpack.c.l.b16 %v45
  %v372 = vunpack.c.h.b16 %v45
  %v373 = vunpack.c.l.b16 %v46
  %v374 = vunpack.c.h.b16 %v46
  %v375 = vunpack.c.l.b16 %v47
  %v376 = vunpack.c.l.b16 %v48
  %v377 = vunpack.c.h.b16 %v48
  %v378 = vunpack.c.l.b16 %v49
  %v379 = vunpack.c.h.b16 %v49
  %v380 = vunpack.c.l.b16 %v50
  %v381 = vunpack.c.h.b16 %v50
  %v382 = vunpack.c.l.b16 %v51
  %v383 = vunpack.c.h.b16 %v51
  %v384 = vunpack.c.l.b16 %v52
  %v385 = vunpack.c.l.b16 %v53
  %v386 = vunpack.c.h.b16 %v53
  %v387 = vunpack.c.l.b16 %v54
  %v388 = vunpack.c.h.b16 %v54
  %v389 = vunpack.c.l.b16 %v55
  %v390 = vunpack.c.h.b16 %v55
  %v391 = vunpack.c.l.b16 %v56
  %v392 = vunpack.c.h.b16 %v56
  %v393 = vunpack.c.l.b16 %v57
  %v394 = vunpack.c.l.b16 %v58
  %v395 = vunpack.c.h.b16 %v58
  %v396 = vunpack.c.l.b16 %v59
  %v397 = vunpack.c.h.b16 %v59
  %v398 = vunpack.c.l.b16 %v60
  %v399 = vunpack.c.h.b16 %v60
  %v400 = vunpack.c.l.b16 %v61
  %v401 = vunpack.c.h.b16 %v61
  %v402 = vunpack.c.l.b16 %v62
  %v403 = vunpack.c.l.b16 %v63
  %v404 = vunpack.c.h.b16 %v63
  %v405 = vunpack.c.l.b16 %v64
  %v406 = vunpack.c.h.b16 %v64
  %v407 = vunpack.c.l.b16 %v65
  %v408 = vunpack.c.h.b16 %v65
  %v409 = vunpack.c.l.b16 %v66
  %v410 = vunpack.c.h.b16 %v66
  %v411 = vunpack.c.l.b16 %v67
  %v412 = vunpack.c.l.b16 %v68
  %v413 = vunpack.c.h.b16 %v68
  %v414 = vunpack.c.l.b16 %v69
  %v415 = vunpack.c.h.b16 %v69
  %v416 = vunpack.c.l.b16 %v70
  %v417 = vunpack.c.h.b16 %v70
  %v418 = vunpack.c.l.b16 %v71
  %v419 = vunpack.c.h.b16 %v71
  %v420 = vunpack.c.l.b16 %v72
  %v421 = vunpack.c.l.b16 %v73
  %v422 = vunpack.c.h.b16 %v73
  %v423 = vunpack.c.l.b16 %v74
  %v424 = vunpack.c.h.b16 %v74
  %v425 = vunpack.c.l.b16 %v75
  %v426 = vunpack.c.h.b16 %v75
  %v427 = vunpack.c.l.b16 %v76
  %v428 = vunpack.c.h.b16 %v76
  %v429 = vunpack.c.l.b16 %v77
  %v430 = vunpack.c.l.b16 %v78
  %v431 = vunpack.c.h.b16 %v78
  %v432 = vunpack.c.l.b16 %v79
  %v433 = vunpack.c.h.b16 %v79
  %v434 = vunpack.c.l.b16 %v80
  %v435 = vunpack.c.h.b16 %v80
  %v436 = vunpack.c.l.b16 %v81
  %v437 = vunpack.c.h.b16 %v81
  %v438 = vunpack.c.l.b16 %v82
  %v439 = vunpack.c.l.b16 %v83
  %v440 = vunpack.c.h.b16 %v83
  %v441 = vunpack.c.l.b16 %v84
  %v442 = vunpack.c.h.b16 %v84
  %v443 = vunpack.c.l.b16 %v85
  %v444 = vunpack.c.h.b16 %v85
  %v445 = vunpack.c.l.b16 %v86
  %v446 = vunpack.c.h.b16 %v86
  %v447 = vunpack.c.l.b16 %v87
  %v448 = vunpack.c.l.b16 %v88
  %v449 = vunpack.c.h.b16 %v88
  %v450 = vunpack.c.l.b16 %v89
  %v451 = vunpack.c.h.b16 %v89
  %v452 = vunpack.c.l.b16 %v90
  %v453 = vunpack.c.h.b16 %v90
  %v454 = vunpack.c.l.b16 %v91
  %v455 = vunpack.c.h.b16 %v91
  %v456 = vunpack.c.l.b16 %v92
  %v457 = vunpack.c.l.b16 %v93
  %v458 = vunpack.c.h.b16 %v93
  %v459 = vunpack.c.l.b16 %v94
  %v460 = vunpack.c.h.b16 %v94
  %v461 = vunpack.c.l.b16 %v95
  %v462 = vunpack.c.h.b16 %v95
  %v463 = vunpack.c.l.b16 %v96
  %v464 = vunpack.c.h.b16 %v96
  %v465 = vunpack.c.l.b16 %v97
  %v466 = vunpack.c.l.b16 %v98
  %v467 = vunpack.c.h.b16 %v98
  %v468 = vunpack.c.l.b16 %v99
  %v469 = vunpack.c.h.b16 %v99
  %v470 = vunpack.c.l.b16 %v100
  %v471 = vunpack.c.h.b16 %v100
  %v472 = vunpack.c.l.b16 %v101
  %v473 = vunpack.c.h.b16 %v101
  %v474 = vunpack.c.l.b16 %v102
  %v475 = vpack.c.b16 %v340, %v331
  %v476 = vpack.c.b16 %v341, %v332
  %v477 = vpack.c.b16 %v342, %v333
  %v478 = vpack.c.b16 %v343, %v334
  %v479 = vpack.c.b16 %v344, %v335
  %v480 = vpack.c.b16 %v345, %v336
  %v481 = vpack.c.b16 %v346, %v337
  %v482 = vpack.c.b16 %v347, %v338
  %v483 = vpack.c.b16 %v348, %v339
  %v484 = vpack.c.b16 %v358, %v349
  %v485 = vpack.c.b16 %v359, %v350
  %v486 = vpack.c.b16 %v360, %v351
  %v487 = vpack.c.b16 %v361, %v352
  %v488 = vpack.c.b16 %v362, %v353
  %v489 = vpack.c.b16 %v363, %v354
  %v490 = vpack.c.b16 %v364, %v355
  %v491 = vpack.c.b16 %v365, %v356
  %v492 = vpack.c.b16 %v366, %v357
  %v493 = vpack.c.b16 %v376, %v367
  %v494 = vpack.c.b16 %v377, %v368
  %v495 = vpack.c.b16 %v378, %v369
  %v496 = vpack.c.b16 %v379, %v370
  %v497 = vpack.c.b16 %v380, %v371
  %v498 = vpack.c.b16 %v381, %v372
  %v499 = vpack.c.b16 %v382, %v373
  %v500 = vpack.c.b16 %v383, %v374
  %v501 = vpack.c.b16 %v384, %v375
  %v502 = vpack.c.b16 %v394, %v385
  %v503 = vpack.c.b16 %v395, %v386
  %v504 = vpack.c.b16 %v396, %v387
  %v505 = vpack.c.b16 %v397, %v388
  %v506 = vpack.c.b16 %v398, %v389
  %v507 = vpack.c.b16 %v399, %v390
  %v508 = vpack.c.b16 %v400, %v391
  %v509 = vpack.c.b16 %v401, %v392
  %v510 = vpack.c.b16 %v402, %v393
  %v511 = vpack.c.b16 %v412, %v403
  %v512 = vpack.c.b16 %v413, %v404
  %v513 = vpack.c.b16 %v414, %v405
  %v514 = vpack.c.b16 %v415, %v406
  %v515 = vpack.c.b16 %v416, %v407
  %v516 = vpack.c.b16 %v417, %v408
  %v517 = vpack.c.b16 %v418, %v409
  %v518 = vpack.c.b16 %v419, %v410
  %v519 = vpack.c.b16 %v420, %v411
  %v520 = vpack.c.b16 %v430, %v421
  %v521 = vpack.c.b16 %v431, %v422
  %v522 = vpack.c.b16 %v432, %v423
  %v523 = vpack.c.b16 %v433, %v424
  %v524 = vpack.c.b16 %v434, %v425
  %v525 = vpack.c.b16 %v435, %v426
  %v526 = vpack.c.b16 %v436, %v427
  %v527 = vpack.c.b16 %v437, %v428
  %v528 = vpack.c.b16 %v438, %v429
  %v529 = vpack.c.b16 %v448, %v439
  %v530 = vpack.c.b16 %v449, %v440
  %v531 = vpack.c.b16 %v450, %v441
  %v532 = vpack.c.b16 %v451, %v442
  %v533 = vpack.c.b16 %v452, %v443
  %v534 = vpack.c.b16 %v453, %v444
  %v535 = vpack.c.b16 %v454, %v445
  %v536 = vpack.c.b16 %v455, %v446
  %v537 = vpack.c.b16 %v456, %v447
  %v538 = vpack.c.b16 %v466, %v457
  %v539 = vpack.c.b16 %v467, %v458
  %v540 = vpack.c.b16 %v468, %v459
  %v541 = vpack.c.b16 %v469, %v460
  %v542 = vpack.c.b16 %v470, %v461
  %v543 = vpack.c.b16 %v471, %v462
  %v544 = vpack.c.b16 %v472, %v463
  %v545 = vpack.c.b16 %v473, %v464
  %v546 = vpack.c.b16 %v474, %v465
  %v763 = vunpack.c.l.b16 %v103
  %v764 = vunpack.c.l.b16 %v104
  %v765 = vunpack.c.l.b16 %v105
  %v766 = vunpack.c.l.b16 %v106
  %v767 = vunpack.c.l.b16 %v107
  %v768 = vunpack.c.l.b16 %v108
  %v769 = vunpack.c.l.b16 %v109
  %v770 = vunpack.c.l.b16 %v110
  %v771 = vunpack.c.l.b16 %v111
  %v772 = vunpack.c.l.b16 %v112
  %v773 = vunpack.c.l.b16 %v113
  %v774 = vunpack.c.l.b16 %v114
  %v775 = vunpack.c.l.b16 %v115
  %v776 = vunpack.c.l.b16 %v116
  %v777 = vunpack.c.l.b16 %v117
  %v778 = vunpack.c.l.b16 %v118
  %v779 = vunpack.c.l.b16 %v119
  %v780 = vunpack.c.l.b16 %v120
  %v781 = vunpack.c.l.b16 %v121
  %v782 = vunpack.c.l.b16 %v122
  %v783 = vunpack.c.l.b16 %v123
  %v784 = vunpack.c.l.b16 %v124
  %v785 = vunpack.c.l.b16 %v125
  %v786 = vunpack.c.l.b16 %v126
  %v787 = vunpack.c.l.b16 %v127
  %v788 = vunpack.c.l.b16 %v128
  %v789 = vunpack.c.l.b16 %v129
  %v790 = vunpack.c.l.b16 %v130
  %v791 = vunpack.c.l.b16 %v131
  %v792 = vunpack.c.l.b16 %v132
  %v793 = vunpack.c.l.b16 %v133
  %v794 = vunpack.c.l.b16 %v134
  %v795 = vunpack.c.l.b16 %v135
  %v796 = vunpack.c.l.b16 %v136
  %v797 = vunpack.c.l.b16 %v137
  %v798 = vunpack.c.l.b16 %v138
  %v799 = vunpack.c.l.b16 %v139
  %v800 = vunpack.c.l.b16 %v140
  %v801 = vunpack.c.l.b16 %v141
  %v802 = vunpack.c.l.b16 %v142
  %v803 = vunpack.c.l.b16 %v143
  %v804 = vunpack.c.l.b16 %v144
  %v805 = vunpack.c.l.b16 %v145
  %v806 = vunpack.c.l.b16 %v146
  %v807 = vunpack.c.l.b16 %v147
  %v808 = vunpack.c.l.b16 %v148
  %v809 = vunpack.c.l.b16 %v149
  %v810 = vunpack.c.l.b16 %v150
  %v811 = vunpack.c.l.b16 %v151
  %v812 = vunpack.c.l.b16 %v152
  %v813 = vunpack.c.l.b16 %v153
  %v814 = vunpack.c.l.b16 %v154
  %v815 = vunpack.c.l.b16 %v155
  %v816 = vunpack.c.l.b16 %v156
  %v817 = vunpack.c.l.b16 %v157
  %v818 = vunpack.c.l.b16 %v158
  %v819 = vunpack.c.l.b16 %v159
  %v820 = vunpack.c.l.b16 %v160
  %v821 = vunpack.c.l.b16 %v161
  %v822 = vunpack.c.l.b16 %v162
  %v823 = vunpack.c.l.b16 %v163
  %v824 = vunpack.c.l.b16 %v164
  %v825 = vunpack.c.l.b16 %v165
  %v826 = vunpack.c.l.b16 %v166
  %v827 = vunpack.c.l.b16 %v167
  %v828 = vunpack.c.l.b16 %v168
  %v829 = vunpack.c.l.b16 %v169
  %v830 = vunpack.c.l.b16 %v170
  %v831 = vunpack.c.l.b16 %v171
  %v832 = vunpack.c.l.b16 %v172
  %v833 = vunpack.c.l.b16 %v173
  %v834 = vunpack.c.l.b16 %v174
  %v835 = vunpack.c.l.b16 %v175
  %v836 = vunpack.c.l.b16 %v176
  %v837 = vunpack.c.l.b16 %v177
  %v838 = vunpack.c.l.b16 %v178
  %v839 = vunpack.c.l.b16 %v179
  %v840 = vunpack.c.l.b16 %v180
  %v841 = vunpack.c.l.b16 %v181
  %v842 = vunpack.c.l.b16 %v182
  %v843 = vunpack.c.l.b16 %v183
  %v844 = vunpack.c.l.b16 %v184
  %v845 = vunpack.c.l.b16 %v185
  %v846 = vunpack.c.l.b16 %v186
  %v847 = vunpack.c.l.b16 %v187
  %v848 = vunpack.c.l.b16 %v188
  %v849 = vunpack.c.l.b16 %v189
  %v850 = vunpack.c.l.b16 %v190
  %v851 = vunpack.c.l.b16 %v191
  %v852 = vunpack.c.l.b16 %v192
  %v853 = vunpack.c.l.b16 %v193
  %v854 = vunpack.c.l.b16 %v194
  %v855 = vunpack.c.l.b16 %v195
  %v856 = vunpack.c.l.b16 %v196
  %v857 = vunpack.c.l.b16 %v197
  %v858 = vunpack.c.l.b16 %v198
  %v859 = vunpack.c.l.b16 %v199
  %v860 = vunpack.c.l.b16 %v200
  %v861 = vunpack.c.l.b16 %v201
  %v862 = vunpack.c.l.b16 %v202
  %v863 = vunpack.c.l.b16 %v203
  %v864 = vunpack.c.l.b16 %v204
  %v865 = vunpack.c.l.b16 %v205
  %v866 = vunpack.c.l.b16 %v206
  %v867 = vunpack.c.l.b16 %v207
  %v868 = vunpack.c.l.b16 %v208
  %v869 = vunpack.c.l.b16 %v209
  %v870 = vunpack.c.l.b16 %v210
  %v871 = vunpack.c.l.b16 %v211
  %v872 = vunpack.c.l.b16 %v212
  %v873 = vunpack.c.l.b16 %v213
  %v874 = vunpack.c.l.b16 %v214
  %v875 = vunpack.c.l.b16 %v215
  %v876 = vunpack.c.l.b16 %v216
  %v877 = vunpack.c.l.b16 %v217
  %v878 = vunpack.c.l.b16 %v218
  %v879 = vunpack.c.l.b16 %v219
  %v880 = vunpack.c.l.b16 %v220
  %v881 = vunpack.c.l.b16 %v221
  %v882 = vunpack.c.l.b16 %v222
  %v883 = vunpack.c.l.b16 %v223
  %v884 = vunpack.c.l.b16 %v224
  %v885 = vunpack.c.l.b16 %v225
  %v886 = vunpack.c.l.b16 %v226
  %v887 = vunpack.c.l.b16 %v227
  %v888 = vunpack.c.l.b16 %v228
  %v889 = vunpack.c.l.b16 %v229
  %v890 = vunpack.c.l.b16 %v230
  %v891 = vunpack.c.l.b16 %v231
  %v892 = vunpack.c.l.b16 %v232
  %v893 = vunpack.c.l.b16 %v233
  %v894 = vunpack.c.l.b16 %v234
  %v895 = vunpack.c.l.b16 %v235
  %v896 = vunpack.c.l.b16 %v236
  %v897 = vunpack.c.l.b16 %v237
  %v898 = vunpack.c.l.b16 %v238
  %v899 = vunpack.c.l.b16 %v239
  %v900 = vunpack.c.l.b16 %v240
  %v901 = vunpack.c.l.b16 %v241
  %v902 = vunpack.c.l.b16 %v242
  %v903 = vunpack.c.l.b16 %v243
  %v904 = vunpack.c.l.b16 %v244
  %v905 = vunpack.c.l.b16 %v245
  %v906 = vunpack.c.l.b16 %v246
  %v907 = vpack.c.b16 %v764, %v763
  %v908 = vpack.c.b16 %v766, %v765
  %v909 = vpack.c.b16 %v768, %v767
  %v910 = vpack.c.b16 %v770, %v769
  %v911 = vpack.c.b16 %v772, %v771
  %v912 = vpack.c.b16 %v774, %v773
  %v913 = vpack.c.b16 %v776, %v775
  %v914 = vpack.c.b16 %v778, %v777
  %v915 = vpack.c.b16 %v780, %v779
  %v916 = vpack.c.b16 %v782, %v781
  %v917 = vpack.c.b16 %v784, %v783
  %v918 = vpack.c.b16 %v786, %v785
  %v919 = vpack.c.b16 %v788, %v787
  %v920 = vpack.c.b16 %v790, %v789
  %v921 = vpack.c.b16 %v792, %v791
  %v922 = vpack.c.b16 %v794, %v793
  %v923 = vpack.c.b16 %v796, %v795
  %v924 = vpack.c.b16 %v798, %v797
  %v925 = vpack.c.b16 %v800, %v799
  %v926 = vpack.c.b16 %v802, %v801
  %v927 = vpack.c.b16 %v804, %v803
  %v928 = vpack.c.b16 %v806, %v805
  %v929 = vpack.c.b16 %v808, %v807
  %v930 = vpack.c.b16 %v810, %v809
  %v931 = vpack.c.b16 %v812, %v811
  %v932 = vpack.c.b16 %v814, %v813
  %v933 = vpack.c.b16 %v816, %v815
  %v934 = vpack.c.b16 %v818, %v817
  %v935 = vpack.c.b16 %v820, %v819
  %v936 = vpack.c.b16 %v822, %v821
  %v937 = vpack.c.b16 %v824, %v823
  %v938 = vpack.c.b16 %v826, %v825
  %v939 = vpack.c.b16 %v828, %v827
  %v940 = vpack.c.b16 %v830, %v829
  %v941 = vpack.c.b16 %v832, %v831
  %v942 = vpack.c.b16 %v834, %v833
  %v943 = vpack.c.b16 %v836, %v835
  %v944 = vpack.c.b16 %v838, %v837
  %v945 = vpack.c.b16 %v840, %v839
  %v946 = vpack.c.b16 %v842, %v841
  %v947 = vpack.c.b16 %v844, %v843
  %v948 = vpack.c.b16 %v846, %v845
  %v949 = vpack.c.b16 %v848, %v847
  %v950 = vpack.c.b16 %v850, %v849
  %v951 = vpack.c.b16 %v852, %v851
  %v952 = vpack.c.b16 %v854, %v853
  %v953 = vpack.c.b16 %v856, %v855
  %v954 = vpack.c.b16 %v858, %v857
  %v955 = vpack.c.b16 %v860, %v859
  %v956 = vpack.c.b16 %v862, %v861
  %v957 = vpack.c.b16 %v864, %v863
  %v958 = vpack.c.b16 %v866, %v865
  %v959 = vpack.c.b16 %v868, %v867
  %v960 = vpack.c.b16 %v870, %v869
  %v961 = vpack.c.b16 %v872, %v871
  %v962 = vpack.c.b16 %v874, %v873
  %v963 = vpack.c.b16 %v876, %v875
  %v964 = vpack.c.b16 %v878, %v877
  %v965 = vpack.c.b16 %v880, %v879
  %v966 = vpack.c.b16 %v882, %v881
  %v967 = vpack.c.b16 %v884, %v883
  %v968 = vpack.c.b16 %v886, %v885
  %v969 = vpack.c.b16 %v888, %v887
  %v970 = vpack.c.b16 %v890, %v889
  %v971 = vpack.c.b16 %v892, %v891
  %v972 = vpack.c.b16 %v894, %v893
  %v973 = vpack.c.b16 %v896, %v895
  %v974 = vpack.c.b16 %v898, %v897
  %v975 = vpack.c.b16 %v900, %v899
  %v976 = vpack.c.b16 %v902, %v901
  %v977 = vpack.c.b16 %v904, %v903
  %v978 = vpack.c.b16 %v906, %v905
  %1051 = vmatpush.bf16.msra.mxu0 %v914
  %1052 = vmatpush.bf16.msra.mxu0 %v913
  %1053 = vmatpush.bf16.msra.mxu0 %v912
  %1054 = vmatpush.bf16.msra.mxu0 %v911
  %1055 = vmatpush.bf16.msra.mxu0 %v910
  %1056 = vmatpush.bf16.msra.mxu0 %v909
  %1057 = vmatpush.bf16.msra.mxu0 %v908
  %1058 = vmatpush.bf16.msra.mxu0 %v907
  %1059 = vmatmul.bf16.gmra.mxu0 %v475
  %v1060 = vpop.f32.mrf.mxu0
  %v1061 = vadd.f32 %v249, %v1060
  %v1062 = vpop.f32.mrf.mxu0
  %v1063 = vadd.f32 %v249, %v1062
  %1064 = vmatmul.bf16.gmra.mxu0 %v484
  %v1065 = vpop.f32.mrf.mxu0
  %v1066 = vadd.f32 %v249, %v1065
  %v1067 = vpop.f32.mrf.mxu0
  %v1068 = vadd.f32 %v249, %v1067
  %1069 = vmatmul.bf16.gmra.mxu0 %v493
  %v1070 = vpop.f32.mrf.mxu0
  %v1071 = vadd.f32 %v249, %v1070
  %v1072 = vpop.f32.mrf.mxu0
  %v1073 = vadd.f32 %v249, %v1072
  %1074 = vmatmul.bf16.gmra.mxu0 %v502
  %v1075 = vpop.f32.mrf.mxu0
  %v1076 = vadd.f32 %v249, %v1075
  %v1077 = vpop.f32.mrf.mxu0
  %v1078 = vadd.f32 %v249, %v1077
  %1079 = vmatmul.bf16.gmra.mxu0 %v511
  %v1080 = vpop.f32.mrf.mxu0
  %v1081 = vadd.f32 %v249, %v1080
  %v1082 = vpop.f32.mrf.mxu0
  %v1083 = vadd.f32 %v249, %v1082
  %1084 = vmatmul.bf16.gmra.mxu0 %v520
  %v1085 = vpop.f32.mrf.mxu0
  %v1086 = vadd.f32 %v249, %v1085
  %v1087 = vpop.f32.mrf.mxu0
  %v1088 = vadd.f32 %v249, %v1087
  %1089 = vmatmul.bf16.gmra.mxu0 %v529
  %v1090 = vpop.f32.mrf.mxu0
  %v1091 = vadd.f32 %v249, %v1090
  %v1092 = vpop.f32.mrf.mxu0
  %v1093 = vadd.f32 %v249, %v1092
  %1094 = vmatmul.bf16.gmra.mxu0 %v538
  %v1095 = vpop.f32.mrf.mxu0
  %v1096 = vadd.f32 %v249, %v1095
  %v1097 = vpop.f32.mrf.mxu0
  %v1098 = vadd.f32 %v249, %v1097
  %1099 = vdwg.mxu0
  %1100 = vmatpush.bf16.msra.mxu0 %v922
  %1101 = vmatpush.bf16.msra.mxu0 %v921
  %1102 = vmatpush.bf16.msra.mxu0 %v920
  %1103 = vmatpush.bf16.msra.mxu0 %v919
  %1104 = vmatpush.bf16.msra.mxu0 %v918
  %1105 = vmatpush.bf16.msra.mxu0 %v917
  %1106 = vmatpush.bf16.msra.mxu0 %v916
  %1107 = vmatpush.bf16.msra.mxu0 %v915
  %1108 = vmatmul.bf16.gmra.mxu0 %v476
  %v1109 = vpop.f32.mrf.mxu0
  %v1110 = vadd.f32 %v1061, %v1109
  %v1111 = vpop.f32.mrf.mxu0
  %v1112 = vadd.f32 %v1063, %v1111
  %1113 = vmatmul.bf16.gmra.mxu0 %v485
  %v1114 = vpop.f32.mrf.mxu0
  %v1115 = vadd.f32 %v1066, %v1114
  %v1116 = vpop.f32.mrf.mxu0
  %v1117 = vadd.f32 %v1068, %v1116
  %1118 = vmatmul.bf16.gmra.mxu0 %v494
  %v1119 = vpop.f32.mrf.mxu0
  %v1120 = vadd.f32 %v1071, %v1119
  %v1121 = vpop.f32.mrf.mxu0
  %v1122 = vadd.f32 %v1073, %v1121
  %1123 = vmatmul.bf16.gmra.mxu0 %v503
  %v1124 = vpop.f32.mrf.mxu0
  %v1125 = vadd.f32 %v1076, %v1124
  %v1126 = vpop.f32.mrf.mxu0
  %v1127 = vadd.f32 %v1078, %v1126
  %1128 = vmatmul.bf16.gmra.mxu0 %v512
  %v1129 = vpop.f32.mrf.mxu0
  %v1130 = vadd.f32 %v1081, %v1129
  %v1131 = vpop.f32.mrf.mxu0
  %v1132 = vadd.f32 %v1083, %v1131
  %1133 = vmatmul.bf16.gmra.mxu0 %v521
  %v1134 = vpop.f32.mrf.mxu0
  %v1135 = vadd.f32 %v1086, %v1134
  %v1136 = vpop.f32.mrf.mxu0
  %v1137 = vadd.f32 %v1088, %v1136
  %1138 = vmatmul.bf16.gmra.mxu0 %v530
  %v1139 = vpop.f32.mrf.mxu0
  %v1140 = vadd.f32 %v1091, %v1139
  %v1141 = vpop.f32.mrf.mxu0
  %v1142 = vadd.f32 %v1093, %v1141
  %1143 = vmatmul.bf16.gmra.mxu0 %v539
  %v1144 = vpop.f32.mrf.mxu0
  %v1145 = vadd.f32 %v1096, %v1144
  %v1146 = vpop.f32.mrf.mxu0
  %v1147 = vadd.f32 %v1098, %v1146
  %1148 = vdwg.mxu0
  %1149 = vmatpush.bf16.msra.mxu0 %v930
  %1150 = vmatpush.bf16.msra.mxu0 %v929
  %1151 = vmatpush.bf16.msra.mxu0 %v928
  %1152 = vmatpush.bf16.msra.mxu0 %v927
  %1153 = vmatpush.bf16.msra.mxu0 %v926
  %1154 = vmatpush.bf16.msra.mxu0 %v925
  %1155 = vmatpush.bf16.msra.mxu0 %v924
  %1156 = vmatpush.bf16.msra.mxu0 %v923
  %1157 = vmatmul.bf16.gmra.mxu0 %v477
  %v1158 = vpop.f32.mrf.mxu0
  %v1159 = vadd.f32 %v1110, %v1158
  %v1160 = vpop.f32.mrf.mxu0
  %v1161 = vadd.f32 %v1112, %v1160
  %1162 = vmatmul.bf16.gmra.mxu0 %v486
  %v1163 = vpop.f32.mrf.mxu0
  %v1164 = vadd.f32 %v1115, %v1163
  %v1165 = vpop.f32.mrf.mxu0
  %v1166 = vadd.f32 %v1117, %v1165
  %1167 = vmatmul.bf16.gmra.mxu0 %v495
  %v1168 = vpop.f32.mrf.mxu0
  %v1169 = vadd.f32 %v1120, %v1168
  %v1170 = vpop.f32.mrf.mxu0
  %v1171 = vadd.f32 %v1122, %v1170
  %1172 = vmatmul.bf16.gmra.mxu0 %v504
  %v1173 = vpop.f32.mrf.mxu0
  %v1174 = vadd.f32 %v1125, %v1173
  %v1175 = vpop.f32.mrf.mxu0
  %v1176 = vadd.f32 %v1127, %v1175
  %1177 = vmatmul.bf16.gmra.mxu0 %v513
  %v1178 = vpop.f32.mrf.mxu0
  %v1179 = vadd.f32 %v1130, %v1178
  %v1180 = vpop.f32.mrf.mxu0
  %v1181 = vadd.f32 %v1132, %v1180
  %1182 = vmatmul.bf16.gmra.mxu0 %v522
  %v1183 = vpop.f32.mrf.mxu0
  %v1184 = vadd.f32 %v1135, %v1183
  %v1185 = vpop.f32.mrf.mxu0
  %v1186 = vadd.f32 %v1137, %v1185
  %1187 = vmatmul.bf16.gmra.mxu0 %v531
  %v1188 = vpop.f32.mrf.mxu0
  %v1189 = vadd.f32 %v1140, %v1188
  %v1190 = vpop.f32.mrf.mxu0
  %v1191 = vadd.f32 %v1142, %v1190
  %1192 = vmatmul.bf16.gmra.mxu0 %v540
  %v1193 = vpop.f32.mrf.mxu0
  %v1194 = vadd.f32 %v1145, %v1193
  %v1195 = vpop.f32.mrf.mxu0
  %v1196 = vadd.f32 %v1147, %v1195
  %1197 = vdwg.mxu0
  %1198 = vmatpush.bf16.msra.mxu0 %v938
  %1199 = vmatpush.bf16.msra.mxu0 %v937
  %1200 = vmatpush.bf16.msra.mxu0 %v936
  %1201 = vmatpush.bf16.msra.mxu0 %v935
  %1202 = vmatpush.bf16.msra.mxu0 %v934
  %1203 = vmatpush.bf16.msra.mxu0 %v933
  %1204 = vmatpush.bf16.msra.mxu0 %v932
  %1205 = vmatpush.bf16.msra.mxu0 %v931
  %1206 = vmatmul.bf16.gmra.mxu0 %v478
  %v1207 = vpop.f32.mrf.mxu0
  %v1208 = vadd.f32 %v1159, %v1207
  %v1209 = vpop.f32.mrf.mxu0
  %v1210 = vadd.f32 %v1161, %v1209
  %1211 = vmatmul.bf16.gmra.mxu0 %v487
  %v1212 = vpop.f32.mrf.mxu0
  %v1213 = vadd.f32 %v1164, %v1212
  %v1214 = vpop.f32.mrf.mxu0
  %v1215 = vadd.f32 %v1166, %v1214
  %1216 = vmatmul.bf16.gmra.mxu0 %v496
  %v1217 = vpop.f32.mrf.mxu0
  %v1218 = vadd.f32 %v1169, %v1217
  %v1219 = vpop.f32.mrf.mxu0
  %v1220 = vadd.f32 %v1171, %v1219
  %1221 = vmatmul.bf16.gmra.mxu0 %v505
  %v1222 = vpop.f32.mrf.mxu0
  %v1223 = vadd.f32 %v1174, %v1222
  %v1224 = vpop.f32.mrf.mxu0
  %v1225 = vadd.f32 %v1176, %v1224
  %1226 = vmatmul.bf16.gmra.mxu0 %v514
  %v1227 = vpop.f32.mrf.mxu0
  %v1228 = vadd.f32 %v1179, %v1227
  %v1229 = vpop.f32.mrf.mxu0
  %v1230 = vadd.f32 %v1181, %v1229
  %1231 = vmatmul.bf16.gmra.mxu0 %v523
  %v1232 = vpop.f32.mrf.mxu0
  %v1233 = vadd.f32 %v1184, %v1232
  %v1234 = vpop.f32.mrf.mxu0
  %v1235 = vadd.f32 %v1186, %v1234
  %1236 = vmatmul.bf16.gmra.mxu0 %v532
  %v1237 = vpop.f32.mrf.mxu0
  %v1238 = vadd.f32 %v1189, %v1237
  %v1239 = vpop.f32.mrf.mxu0
  %v1240 = vadd.f32 %v1191, %v1239
  %1241 = vmatmul.bf16.gmra.mxu0 %v541
  %v1242 = vpop.f32.mrf.mxu0
  %v1243 = vadd.f32 %v1194, %v1242
  %v1244 = vpop.f32.mrf.mxu0
  %v1245 = vadd.f32 %v1196, %v1244
  %1246 = vdwg.mxu0
  %1247 = vmatpush.bf16.msra.mxu0 %v946
  %1248 = vmatpush.bf16.msra.mxu0 %v945
  %1249 = vmatpush.bf16.msra.mxu0 %v944
  %1250 = vmatpush.bf16.msra.mxu0 %v943
  %1251 = vmatpush.bf16.msra.mxu0 %v942
  %1252 = vmatpush.bf16.msra.mxu0 %v941
  %1253 = vmatpush.bf16.msra.mxu0 %v940
  %1254 = vmatpush.bf16.msra.mxu0 %v939
  %1255 = vmatmul.bf16.gmra.mxu0 %v479
  %v1256 = vpop.f32.mrf.mxu0
  %v1257 = vadd.f32 %v1208, %v1256
  %v1258 = vpop.f32.mrf.mxu0
  %v1259 = vadd.f32 %v1210, %v1258
  %1260 = vmatmul.bf16.gmra.mxu0 %v488
  %v1261 = vpop.f32.mrf.mxu0
  %v1262 = vadd.f32 %v1213, %v1261
  %v1263 = vpop.f32.mrf.mxu0
  %v1264 = vadd.f32 %v1215, %v1263
  %1265 = vmatmul.bf16.gmra.mxu0 %v497
  %v1266 = vpop.f32.mrf.mxu0
  %v1267 = vadd.f32 %v1218, %v1266
  %v1268 = vpop.f32.mrf.mxu0
  %v1269 = vadd.f32 %v1220, %v1268
  %1270 = vmatmul.bf16.gmra.mxu0 %v506
  %v1271 = vpop.f32.mrf.mxu0
  %v1272 = vadd.f32 %v1223, %v1271
  %v1273 = vpop.f32.mrf.mxu0
  %v1274 = vadd.f32 %v1225, %v1273
  %1275 = vmatmul.bf16.gmra.mxu0 %v515
  %v1276 = vpop.f32.mrf.mxu0
  %v1277 = vadd.f32 %v1228, %v1276
  %v1278 = vpop.f32.mrf.mxu0
  %v1279 = vadd.f32 %v1230, %v1278
  %1280 = vmatmul.bf16.gmra.mxu0 %v524
  %v1281 = vpop.f32.mrf.mxu0
  %v1282 = vadd.f32 %v1233, %v1281
  %v1283 = vpop.f32.mrf.mxu0
  %v1284 = vadd.f32 %v1235, %v1283
  %1285 = vmatmul.bf16.gmra.mxu0 %v533
  %v1286 = vpop.f32.mrf.mxu0
  %v1287 = vadd.f32 %v1238, %v1286
  %v1288 = vpop.f32.mrf.mxu0
  %v1289 = vadd.f32 %v1240, %v1288
  %1290 = vmatmul.bf16.gmra.mxu0 %v542
  %v1291 = vpop.f32.mrf.mxu0
  %v1292 = vadd.f32 %v1243, %v1291
  %v1293 = vpop.f32.mrf.mxu0
  %v1294 = vadd.f32 %v1245, %v1293
  %1295 = vdwg.mxu0
  %1296 = vmatpush.bf16.msra.mxu0 %v954
  %1297 = vmatpush.bf16.msra.mxu0 %v953
  %1298 = vmatpush.bf16.msra.mxu0 %v952
  %1299 = vmatpush.bf16.msra.mxu0 %v951
  %1300 = vmatpush.bf16.msra.mxu0 %v950
  %1301 = vmatpush.bf16.msra.mxu0 %v949
  %1302 = vmatpush.bf16.msra.mxu0 %v948
  %1303 = vmatpush.bf16.msra.mxu0 %v947
  %1304 = vmatmul.bf16.gmra.mxu0 %v480
  %v1305 = vpop.f32.mrf.mxu0
  %v1306 = vadd.f32 %v1257, %v1305
  %v1307 = vpop.f32.mrf.mxu0
  %v1308 = vadd.f32 %v1259, %v1307
  %1309 = vmatmul.bf16.gmra.mxu0 %v489
  %v1310 = vpop.f32.mrf.mxu0
  %v1311 = vadd.f32 %v1262, %v1310
  %v1312 = vpop.f32.mrf.mxu0
  %v1313 = vadd.f32 %v1264, %v1312
  %1314 = vmatmul.bf16.gmra.mxu0 %v498
  %v1315 = vpop.f32.mrf.mxu0
  %v1316 = vadd.f32 %v1267, %v1315
  %v1317 = vpop.f32.mrf.mxu0
  %v1318 = vadd.f32 %v1269, %v1317
  %1319 = vmatmul.bf16.gmra.mxu0 %v507
  %v1320 = vpop.f32.mrf.mxu0
  %v1321 = vadd.f32 %v1272, %v1320
  %v1322 = vpop.f32.mrf.mxu0
  %v1323 = vadd.f32 %v1274, %v1322
  %1324 = vmatmul.bf16.gmra.mxu0 %v516
  %v1325 = vpop.f32.mrf.mxu0
  %v1326 = vadd.f32 %v1277, %v1325
  %v1327 = vpop.f32.mrf.mxu0
  %v1328 = vadd.f32 %v1279, %v1327
  %1329 = vmatmul.bf16.gmra.mxu0 %v525
  %v1330 = vpop.f32.mrf.mxu0
  %v1331 = vadd.f32 %v1282, %v1330
  %v1332 = vpop.f32.mrf.mxu0
  %v1333 = vadd.f32 %v1284, %v1332
  %1334 = vmatmul.bf16.gmra.mxu0 %v534
  %v1335 = vpop.f32.mrf.mxu0
  %v1336 = vadd.f32 %v1287, %v1335
  %v1337 = vpop.f32.mrf.mxu0
  %v1338 = vadd.f32 %v1289, %v1337
  %1339 = vmatmul.bf16.gmra.mxu0 %v543
  %v1340 = vpop.f32.mrf.mxu0
  %v1341 = vadd.f32 %v1292, %v1340
  %v1342 = vpop.f32.mrf.mxu0
  %v1343 = vadd.f32 %v1294, %v1342
  %1344 = vdwg.mxu0
  %1345 = vmatpush.bf16.msra.mxu0 %v962
  %1346 = vmatpush.bf16.msra.mxu0 %v961
  %1347 = vmatpush.bf16.msra.mxu0 %v960
  %1348 = vmatpush.bf16.msra.mxu0 %v959
  %1349 = vmatpush.bf16.msra.mxu0 %v958
  %1350 = vmatpush.bf16.msra.mxu0 %v957
  %1351 = vmatpush.bf16.msra.mxu0 %v956
  %1352 = vmatpush.bf16.msra.mxu0 %v955
  %1353 = vmatmul.bf16.gmra.mxu0 %v481
  %v1354 = vpop.f32.mrf.mxu0
  %v1355 = vadd.f32 %v1306, %v1354
  %v1356 = vpop.f32.mrf.mxu0
  %v1357 = vadd.f32 %v1308, %v1356
  %1358 = vmatmul.bf16.gmra.mxu0 %v490
  %v1359 = vpop.f32.mrf.mxu0
  %v1360 = vadd.f32 %v1311, %v1359
  %v1361 = vpop.f32.mrf.mxu0
  %v1362 = vadd.f32 %v1313, %v1361
  %1363 = vmatmul.bf16.gmra.mxu0 %v499
  %v1364 = vpop.f32.mrf.mxu0
  %v1365 = vadd.f32 %v1316, %v1364
  %v1366 = vpop.f32.mrf.mxu0
  %v1367 = vadd.f32 %v1318, %v1366
  %1368 = vmatmul.bf16.gmra.mxu0 %v508
  %v1369 = vpop.f32.mrf.mxu0
  %v1370 = vadd.f32 %v1321, %v1369
  %v1371 = vpop.f32.mrf.mxu0
  %v1372 = vadd.f32 %v1323, %v1371
  %1373 = vmatmul.bf16.gmra.mxu0 %v517
  %v1374 = vpop.f32.mrf.mxu0
  %v1375 = vadd.f32 %v1326, %v1374
  %v1376 = vpop.f32.mrf.mxu0
  %v1377 = vadd.f32 %v1328, %v1376
  %1378 = vmatmul.bf16.gmra.mxu0 %v526
  %v1379 = vpop.f32.mrf.mxu0
  %v1380 = vadd.f32 %v1331, %v1379
  %v1381 = vpop.f32.mrf.mxu0
  %v1382 = vadd.f32 %v1333, %v1381
  %1383 = vmatmul.bf16.gmra.mxu0 %v535
  %v1384 = vpop.f32.mrf.mxu0
  %v1385 = vadd.f32 %v1336, %v1384
  %v1386 = vpop.f32.mrf.mxu0
  %v1387 = vadd.f32 %v1338, %v1386
  %1388 = vmatmul.bf16.gmra.mxu0 %v544
  %v1389 = vpop.f32.mrf.mxu0
  %v1390 = vadd.f32 %v1341, %v1389
  %v1391 = vpop.f32.mrf.mxu0
  %v1392 = vadd.f32 %v1343, %v1391
  %1393 = vdwg.mxu0
  %1394 = vmatpush.bf16.msra.mxu0 %v970
  %1395 = vmatpush.bf16.msra.mxu0 %v969
  %1396 = vmatpush.bf16.msra.mxu0 %v968
  %1397 = vmatpush.bf16.msra.mxu0 %v967
  %1398 = vmatpush.bf16.msra.mxu0 %v966
  %1399 = vmatpush.bf16.msra.mxu0 %v965
  %1400 = vmatpush.bf16.msra.mxu0 %v964
  %1401 = vmatpush.bf16.msra.mxu0 %v963
  %1402 = vmatmul.bf16.gmra.mxu0 %v482
  %v1403 = vpop.f32.mrf.mxu0
  %v1404 = vadd.f32 %v1355, %v1403
  %v1405 = vpop.f32.mrf.mxu0
  %v1406 = vadd.f32 %v1357, %v1405
  %1407 = vmatmul.bf16.gmra.mxu0 %v491
  %v1408 = vpop.f32.mrf.mxu0
  %v1409 = vadd.f32 %v1360, %v1408
  %v1410 = vpop.f32.mrf.mxu0
  %v1411 = vadd.f32 %v1362, %v1410
  %1412 = vmatmul.bf16.gmra.mxu0 %v500
  %v1413 = vpop.f32.mrf.mxu0
  %v1414 = vadd.f32 %v1365, %v1413
  %v1415 = vpop.f32.mrf.mxu0
  %v1416 = vadd.f32 %v1367, %v1415
  %1417 = vmatmul.bf16.gmra.mxu0 %v509
  %v1418 = vpop.f32.mrf.mxu0
  %v1419 = vadd.f32 %v1370, %v1418
  %v1420 = vpop.f32.mrf.mxu0
  %v1421 = vadd.f32 %v1372, %v1420
  %1422 = vmatmul.bf16.gmra.mxu0 %v518
  %v1423 = vpop.f32.mrf.mxu0
  %v1424 = vadd.f32 %v1375, %v1423
  %v1425 = vpop.f32.mrf.mxu0
  %v1426 = vadd.f32 %v1377, %v1425
  %1427 = vmatmul.bf16.gmra.mxu0 %v527
  %v1428 = vpop.f32.mrf.mxu0
  %v1429 = vadd.f32 %v1380, %v1428
  %v1430 = vpop.f32.mrf.mxu0
  %v1431 = vadd.f32 %v1382, %v1430
  %1432 = vmatmul.bf16.gmra.mxu0 %v536
  %v1433 = vpop.f32.mrf.mxu0
  %v1434 = vadd.f32 %v1385, %v1433
  %v1435 = vpop.f32.mrf.mxu0
  %v1436 = vadd.f32 %v1387, %v1435
  %1437 = vmatmul.bf16.gmra.mxu0 %v545
  %v1438 = vpop.f32.mrf.mxu0
  %v1439 = vadd.f32 %v1390, %v1438
  %v1440 = vpop.f32.mrf.mxu0
  %v1441 = vadd.f32 %v1392, %v1440
  %1442 = vdwg.mxu0
  %1443 = vmatpush.bf16.msra.mxu0 %v978
  %1444 = vmatpush.bf16.msra.mxu0 %v977
  %1445 = vmatpush.bf16.msra.mxu0 %v976
  %1446 = vmatpush.bf16.msra.mxu0 %v975
  %1447 = vmatpush.bf16.msra.mxu0 %v974
  %1448 = vmatpush.bf16.msra.mxu0 %v973
  %1449 = vmatpush.bf16.msra.mxu0 %v972
  %1450 = vmatpush.bf16.msra.mxu0 %v971
  %1451 = vmatmul.bf16.gmra.mxu0 %v483
  %v1452 = vpop.f32.mrf.mxu0
  %v1453 = vadd.f32 %v1404, %v1452
  %v1454 = vpop.f32.mrf.mxu0
  %v1455 = vadd.f32 %v1406, %v1454
  %1456 = vmatmul.bf16.gmra.mxu0 %v492
  %v1457 = vpop.f32.mrf.mxu0
  %v1458 = vadd.f32 %v1409, %v1457
  %v1459 = vpop.f32.mrf.mxu0
  %v1460 = vadd.f32 %v1411, %v1459
  %1461 = vmatmul.bf16.gmra.mxu0 %v501
  %v1462 = vpop.f32.mrf.mxu0
  %v1463 = vadd.f32 %v1414, %v1462
  %v1464 = vpop.f32.mrf.mxu0
  %v1465 = vadd.f32 %v1416, %v1464
  %1466 = vmatmul.bf16.gmra.mxu0 %v510
  %v1467 = vpop.f32.mrf.mxu0
  %v1468 = vadd.f32 %v1419, %v1467
  %v1469 = vpop.f32.mrf.mxu0
  %v1470 = vadd.f32 %v1421, %v1469
  %1471 = vmatmul.bf16.gmra.mxu0 %v519
  %v1472 = vpop.f32.mrf.mxu0
  %v1473 = vadd.f32 %v1424, %v1472
  %v1474 = vpop.f32.mrf.mxu0
  %v1475 = vadd.f32 %v1426, %v1474
  %1476 = vmatmul.bf16.gmra.mxu0 %v528
  %v1477 = vpop.f32.mrf.mxu0
  %v1478 = vadd.f32 %v1429, %v1477
  %v1479 = vpop.f32.mrf.mxu0
  %v1480 = vadd.f32 %v1431, %v1479
  %1481 = vmatmul.bf16.gmra.mxu0 %v537
  %v1482 = vpop.f32.mrf.mxu0
  %v1483 = vadd.f32 %v1434, %v1482
  %v1484 = vpop.f32.mrf.mxu0
  %v1485 = vadd.f32 %v1436, %v1484
  %1486 = vmatmul.bf16.gmra.mxu0 %v546
  %v1487 = vpop.f32.mrf.mxu0
  %v1488 = vadd.f32 %v1439, %v1487
  %v1489 = vpop.f32.mrf.mxu0
  %v1490 = vadd.f32 %v1441, %v1489
  %1491 = vdwg.mxu0
  %v1492 = vmax.f32 %v1453, 0.0
  %v1493 = vmax.f32 %v1455, 0.0
  %v1494 = vmax.f32 %v1458, 0.0
  %v1495 = vmax.f32 %v1460, 0.0
  %v1496 = vmax.f32 %v1463, 0.0
  %v1497 = vmax.f32 %v1465, 0.0
  %v1498 = vmax.f32 %v1468, 0.0
  %v1499 = vmax.f32 %v1470, 0.0
  %v1500 = vmax.f32 %v1473, 0.0
  %v1501 = vmax.f32 %v1475, 0.0
  %v1502 = vmax.f32 %v1478, 0.0
  %v1503 = vmax.f32 %v1480, 0.0
  %v1504 = vmax.f32 %v1483, 0.0
  %v1505 = vmax.f32 %v1485, 0.0
  %v1506 = vmax.f32 %v1488, 0.0
  %v1507 = vmax.f32 %v1490, 0.0
  %1524 = vrot.lane.b32.xlu0 %v1492, 64
  %v1525 = vpop.permute.xlu0 %1524
  %1526 = vrot.lane.b32.xlu0 %v1493, 64
  %v1527 = vpop.permute.xlu0 %1526
  %1528 = vrot.lane.b32.xlu0 %v1494, 64
  %v1529 = vpop.permute.xlu0 %1528
  %1530 = vrot.lane.b32.xlu0 %v1495, 64
  %v1531 = vpop.permute.xlu0 %1530
  %1532 = vrot.lane.b32.xlu0 %v1496, 64
  %v1533 = vpop.permute.xlu0 %1532
  %1534 = vrot.lane.b32.xlu0 %v1497, 64
  %v1535 = vpop.permute.xlu0 %1534
  %1536 = vrot.lane.b32.xlu0 %v1498, 64
  %v1537 = vpop.permute.xlu0 %1536
  %1538 = vrot.lane.b32.xlu0 %v1499, 64
  %v1539 = vpop.permute.xlu0 %1538
  %1540 = vrot.lane.b32.xlu0 %v1500, 64
  %v1541 = vpop.permute.xlu0 %1540
  %1542 = vrot.lane.b32.xlu0 %v1501, 64
  %v1543 = vpop.permute.xlu0 %1542
  %1544 = vrot.lane.b32.xlu0 %v1502, 64
  %v1545 = vpop.permute.xlu0 %1544
  %1546 = vrot.lane.b32.xlu0 %v1503, 64
  %v1547 = vpop.permute.xlu0 %1546
  %1548 = vrot.lane.b32.xlu0 %v1504, 64
  %v1549 = vpop.permute.xlu0 %1548
  %1550 = vrot.lane.b32.xlu0 %v1505, 64
  %v1551 = vpop.permute.xlu0 %1550
  %1552 = vrot.lane.b32.xlu0 %v1506, 64
  %v1553 = vpop.permute.xlu0 %1552
  %1554 = vrot.lane.b32.xlu0 %v1507, 64
  %v1555 = vpop.permute.xlu0 %1554
  %v1572 = vadd.f32 %v1492, %v1525
  %v1573 = vadd.f32 %v1493, %v1527
  %v1574 = vadd.f32 %v1494, %v1529
  %v1575 = vadd.f32 %v1495, %v1531
  %v1576 = vadd.f32 %v1496, %v1533
  %v1577 = vadd.f32 %v1497, %v1535
  %v1578 = vadd.f32 %v1498, %v1537
  %v1579 = vadd.f32 %v1499, %v1539
  %v1580 = vadd.f32 %v1500, %v1541
  %v1581 = vadd.f32 %v1501, %v1543
  %v1582 = vadd.f32 %v1502, %v1545
  %v1583 = vadd.f32 %v1503, %v1547
  %v1584 = vadd.f32 %v1504, %v1549
  %v1585 = vadd.f32 %v1505, %v1551
  %v1586 = vadd.f32 %v1506, %v1553
  %v1587 = vadd.f32 %v1507, %v1555
  %vm1588 = vcmask 523264
  %v1589 = vsel %vm1588, %v1572, 0.0
  %v1590 = vsel %vm1588, %v1573, 0.0
  %v1591 = vadd.f32 %v1589, %v1590
  %v1592 = vsel %vm1588, %v1574, 0.0
  %v1593 = vadd.f32 %v1591, %v1592
  %v1594 = vsel %vm1588, %v1575, 0.0
  %v1595 = vadd.f32 %v1593, %v1594
  %v1596 = vsel %vm1588, %v1576, 0.0
  %v1597 = vadd.f32 %v1595, %v1596
  %v1598 = vsel %vm1588, %v1577, 0.0
  %v1599 = vadd.f32 %v1597, %v1598
  %v1600 = vsel %vm1588, %v1578, 0.0
  %v1601 = vadd.f32 %v1599, %v1600
  %v1602 = vsel %vm1588, %v1579, 0.0
  %v1603 = vadd.f32 %v1601, %v1602
  %v1604 = vrot.slane %v1603, 4
  %v1605 = vadd.f32 %v1603, %v1604
  %v1606 = vrot.slane %v1605, 2
  %v1607 = vadd.f32 %v1605, %v1606
  %v1608 = vrot.slane %v1607, 1
  %v1609 = vadd.f32 %v1607, %v1608
  %v1610 = vsel %vm1588, %v1580, 0.0
  %v1611 = vsel %vm1588, %v1581, 0.0
  %v1612 = vadd.f32 %v1610, %v1611
  %v1613 = vsel %vm1588, %v1582, 0.0
  %v1614 = vadd.f32 %v1612, %v1613
  %v1615 = vsel %vm1588, %v1583, 0.0
  %v1616 = vadd.f32 %v1614, %v1615
  %v1617 = vsel %vm1588, %v1584, 0.0
  %v1618 = vadd.f32 %v1616, %v1617
  %v1619 = vsel %vm1588, %v1585, 0.0
  %v1620 = vadd.f32 %v1618, %v1619
  %v1621 = vsel %vm1588, %v1586, 0.0
  %v1622 = vadd.f32 %v1620, %v1621
  %v1623 = vsel %vm1588, %v1587, 0.0
  %v1624 = vadd.f32 %v1622, %v1623
  %v1625 = vrot.slane %v1624, 4
  %v1626 = vadd.f32 %v1624, %v1625
  %v1627 = vrot.slane %v1626, 2
  %v1628 = vadd.f32 %v1626, %v1627
  %v1629 = vrot.slane %v1628, 1
  %v1630 = vadd.f32 %v1628, %v1629
  %v1631 = vmul.f32 %v1609, 0.015625
  %v1632 = vmul.f32 %v1630, 0.015625
  %v1633 = vld [vmem:[%s3] sm:$0xff]
  %v1634 = vld [vmem:[%s3 + $0x8] sm:$0xff]
  %v1635 = vld [vmem:[%s3 + $0x10] sm:$0xff]
  %v1636 = vld [vmem:[%s3 + $0x18] sm:$0xff]
  %v1637 = vld [vmem:[%s3 + $0x20] sm:$0xff]
  %v1638 = vld [vmem:[%s3 + $0x28] sm:$0xff]
  %v1639 = vld [vmem:[%s3 + $0x30] sm:$0xff]
  %v1640 = vld [vmem:[%s3 + $0x38] sm:$0xff]
  %vm1643 = vcmask 1041409
  %v1644 = vsel %vm1643, %v1632, %v1631
  %v1645 = vsel %vm1588, %v1644, 0
  %1647 = vmatpush.msra.mxu0 0.0
  %1648 = vmatpush.msra.mxu0 0.0
  %1649 = vmatpush.msra.mxu0 0.0
  %1650 = vmatpush.msra.mxu0 0.0
  %1651 = vmatpush.msra.mxu0 0.0
  %1652 = vmatpush.msra.mxu0 0.0
  %1653 = vmatpush.msra.mxu0 0.0
  %1654 = vmatpush.msra.mxu0 0.0
  %1655 = vmatpush.msra.mxu0 %v1640
  %1656 = vmatpush.msra.mxu0 %v1639
  %1657 = vmatpush.msra.mxu0 %v1638
  %1658 = vmatpush.msra.mxu0 %v1637
  %1659 = vmatpush.msra.mxu0 %v1636
  %1660 = vmatpush.msra.mxu0 %v1635
  %1661 = vmatpush.msra.mxu0 %v1634
  %1662 = vmatpush.msra.mxu0 %v1633
  %1663 = vmatmul.f32.gmra.mxu0 %v1645
  %v1664 = vpop.f32.mrf.mxu0
  %v1665 = vadd.f32 0.0, %v1664
  %1666 = vdwg.mxu0
  %v1667 = vld [vmem:[%s4] sm:$0x1]
  %v1668 = vperm.slane %v1667, 0
  %v1669 = vmul.f32 %v1665, %v1668
  %v1670 = vld [vmem:[%s4 + $0x1] sm:$0x1]
  %v1671 = vperm.slane %v1670, 0
  %v1672 = vadd.f32 %v1669, %v1671
  %v1673 = vmax.f32 %v1672, 0.0
  %v1674 = vld [vmem:[%s5] sm:$0xff]
  %v1675 = vld [vmem:[%s5 + $0x8] sm:$0xff]
  %v1676 = vld [vmem:[%s5 + $0x10] sm:$0xff]
  %v1677 = vld [vmem:[%s5 + $0x18] sm:$0xff]
  %vm1678 = vcmask 261120
  %v1680 = vsel %vm1678, %v1673, 0
  %1682 = vmatpush.msra.mxu0 0.0
  %1683 = vmatpush.msra.mxu0 0.0
  %1684 = vmatpush.msra.mxu0 0.0
  %1685 = vmatpush.msra.mxu0 0.0
  %1686 = vmatpush.msra.mxu0 0.0
  %1687 = vmatpush.msra.mxu0 0.0
  %1688 = vmatpush.msra.mxu0 0.0
  %1689 = vmatpush.msra.mxu0 0.0
  %1690 = vmatpush.msra.mxu0 0.0
  %1691 = vmatpush.msra.mxu0 0.0
  %1692 = vmatpush.msra.mxu0 0.0
  %1693 = vmatpush.msra.mxu0 0.0
  %1694 = vmatpush.msra.mxu0 %v1677
  %1695 = vmatpush.msra.mxu0 %v1676
  %1696 = vmatpush.msra.mxu0 %v1675
  %1697 = vmatpush.msra.mxu0 %v1674
  %1698 = vmatmul.f32.gmra.mxu0 %v1680
  %v1699 = vpop.f32.mrf.mxu0
  %v1700 = vadd.f32 0.0, %v1699
  %1701 = vdwg.mxu0
  %1703 = vrot.lane.b32.xlu0 %v1700, 64
  %v1704 = vpop.permute.xlu0 %1703
  %v1706 = vmax.f32 %v1700, %v1704
  %v1707 = vsub.f32 %v1700, %v1706
  %v1708 = vmul.f32 %v1707, 1.442695
  %v1709 = vpow.pop %v1708
  %1711 = vrot.lane.b32.xlu0 %v1706, 64
  %v1712 = vpop.permute.xlu0 %1711
  %v1714 = vsub.f32 %v1700, %v1712
  %v1715 = vmul.f32 %v1714, 1.442695
  %v1716 = vpow.pop %v1715
  %1718 = vrot.lane.b32.xlu0 %v1716, 64
  %v1719 = vpop.permute.xlu0 %1718
  %v1721 = vadd.f32 %v1709, %v1719
  %v1722 = vrcp.pop %v1721
  %v1723 = vmul.f32 %v1709, %v1722
  %1725 = vrot.lane.b32.xlu0 %v1722, 64
  %v1726 = vpop.permute.xlu0 %1725
  %v1728 = vmul.f32 %v1716, %v1726
  %v1729 = vsel %vm1588, %v1723, %v1728
  %v1730 = vperm.slane %v1729, 0
  %v1731 = vmul.f32 %v1492, %v1730
  %v1732 = vmul.f32 %v1493, %v1730
  %v1733 = vmul.f32 %v1494, %v1730
  %v1734 = vmul.f32 %v1495, %v1730
  %v1735 = vmul.f32 %v1496, %v1730
  %v1736 = vmul.f32 %v1497, %v1730
  %v1737 = vmul.f32 %v1498, %v1730
  %v1738 = vmul.f32 %v1499, %v1730
  %1747 = vrot.lane.b32.xlu0 %v1731, 64
  %v1748 = vpop.permute.xlu0 %1747
  %1749 = vrot.lane.b32.xlu0 %v1732, 64
  %v1750 = vpop.permute.xlu0 %1749
  %1751 = vrot.lane.b32.xlu0 %v1733, 64
  %v1752 = vpop.permute.xlu0 %1751
  %1753 = vrot.lane.b32.xlu0 %v1734, 64
  %v1754 = vpop.permute.xlu0 %1753
  %1755 = vrot.lane.b32.xlu0 %v1735, 64
  %v1756 = vpop.permute.xlu0 %1755
  %1757 = vrot.lane.b32.xlu0 %v1736, 64
  %v1758 = vpop.permute.xlu0 %1757
  %1759 = vrot.lane.b32.xlu0 %v1737, 64
  %v1760 = vpop.permute.xlu0 %1759
  %1761 = vrot.lane.b32.xlu0 %v1738, 64
  %v1762 = vpop.permute.xlu0 %1761
  %v1771 = vadd.f32 %v1731, %v1748
  %v1772 = vadd.f32 %v1732, %v1750
  %v1773 = vadd.f32 %v1733, %v1752
  %v1774 = vadd.f32 %v1734, %v1754
  %v1775 = vadd.f32 %v1735, %v1756
  %v1776 = vadd.f32 %v1736, %v1758
  %v1777 = vadd.f32 %v1737, %v1760
  %v1778 = vadd.f32 %v1738, %v1762
  %v1779 = vperm.slane %v1729, 1
  %v1780 = vmul.f32 %v1500, %v1779
  %v1781 = vmul.f32 %v1501, %v1779
  %v1782 = vmul.f32 %v1502, %v1779
  %v1783 = vmul.f32 %v1503, %v1779
  %v1784 = vmul.f32 %v1504, %v1779
  %v1785 = vmul.f32 %v1505, %v1779
  %v1786 = vmul.f32 %v1506, %v1779
  %v1787 = vmul.f32 %v1507, %v1779
  %1796 = vrot.lane.b32.xlu0 %v1780, 64
  %v1797 = vpop.permute.xlu0 %1796
  %1798 = vrot.lane.b32.xlu0 %v1781, 64
  %v1799 = vpop.permute.xlu0 %1798
  %1800 = vrot.lane.b32.xlu0 %v1782, 64
  %v1801 = vpop.permute.xlu0 %1800
  %1802 = vrot.lane.b32.xlu0 %v1783, 64
  %v1803 = vpop.permute.xlu0 %1802
  %1804 = vrot.lane.b32.xlu0 %v1784, 64
  %v1805 = vpop.permute.xlu0 %1804
  %1806 = vrot.lane.b32.xlu0 %v1785, 64
  %v1807 = vpop.permute.xlu0 %1806
  %1808 = vrot.lane.b32.xlu0 %v1786, 64
  %v1809 = vpop.permute.xlu0 %1808
  %1810 = vrot.lane.b32.xlu0 %v1787, 64
  %v1811 = vpop.permute.xlu0 %1810
  %v1820 = vadd.f32 %v1780, %v1797
  %v1821 = vadd.f32 %v1781, %v1799
  %v1822 = vadd.f32 %v1782, %v1801
  %v1823 = vadd.f32 %v1783, %v1803
  %v1824 = vadd.f32 %v1784, %v1805
  %v1825 = vadd.f32 %v1785, %v1807
  %v1826 = vadd.f32 %v1786, %v1809
  %v1827 = vadd.f32 %v1787, %v1811
  %1836 = vrot.lane.b32.xlu0 %v1820, 64
  %v1837 = vpop.permute.xlu0 %1836
  %1838 = vrot.lane.b32.xlu0 %v1821, 64
  %v1839 = vpop.permute.xlu0 %1838
  %1840 = vrot.lane.b32.xlu0 %v1822, 64
  %v1841 = vpop.permute.xlu0 %1840
  %1842 = vrot.lane.b32.xlu0 %v1823, 64
  %v1843 = vpop.permute.xlu0 %1842
  %1844 = vrot.lane.b32.xlu0 %v1824, 64
  %v1845 = vpop.permute.xlu0 %1844
  %1846 = vrot.lane.b32.xlu0 %v1825, 64
  %v1847 = vpop.permute.xlu0 %1846
  %1848 = vrot.lane.b32.xlu0 %v1826, 64
  %v1849 = vpop.permute.xlu0 %1848
  %1850 = vrot.lane.b32.xlu0 %v1827, 64
  %v1851 = vpop.permute.xlu0 %1850
  %v1860 = vsel %vm1588, %v1771, %v1837
  %v1861 = vsel %vm1588, %v1772, %v1839
  %v1862 = vsel %vm1588, %v1773, %v1841
  %v1863 = vsel %vm1588, %v1774, %v1843
  %v1864 = vsel %vm1588, %v1775, %v1845
  %v1865 = vsel %vm1588, %v1776, %v1847
  %v1866 = vsel %vm1588, %v1777, %v1849
  %v1867 = vsel %vm1588, %v1778, %v1851
  %1868 = vst [vmem:[%s6] sm:$0xff] %v1860
  %1869 = vst [vmem:[%s6 + $0x8] sm:$0xff] %v1861
  %1870 = vst [vmem:[%s6 + $0x10] sm:$0xff] %v1862
  %1871 = vst [vmem:[%s6 + $0x18] sm:$0xff] %v1863
  %1872 = vst [vmem:[%s6 + $0x20] sm:$0xff] %v1864
  %1873 = vst [vmem:[%s6 + $0x28] sm:$0xff] %v1865
  %1874 = vst [vmem:[%s6 + $0x30] sm:$0xff] %v1866
  %1875 = vst [vmem:[%s6 + $0x38] sm:$0xff] %v1867
  // Predicated region
  $region26: #{sk_layer_pallas.1} parent=0 // pred_check
    _
  $region27: #{sk_layer_pallas.1} parent=0 // pred_check_branch
    %1877 = sbr.rel (0) target = $region29
  $region28: #{sk_layer_pallas.1} parent=0 // pred_region
    _
  $region29: #{sk_layer_pallas.1} parent=0 // pred_fallthru
    _
  // Predicated region
  $region30: #{sk_layer_pallas.1} parent=0 // pred_check
    _
  $region31: #{sk_layer_pallas.1} parent=0 // pred_check_branch
    %1879 = sbr.rel (0) target = $region33
  $region32: #{sk_layer_pallas.1} parent=0 // pred_region
    _
  $region33: #{sk_layer_pallas.1} parent=0 // pred_fallthru
    _

</llo_original>
